<compile_context>
chip_gen: v7x
topology: tpu7x:2x2x1
jax: 0.10.0
libtpu: 0.0.40
codegen_flags: <defaults>
</compile_context>

<pallas_src>
import math
from functools import partial

import jax
import jax.numpy as jnp
from jax.experimental import pallas as pl
from jax.experimental.pallas import tpu as pltpu


def encoder_layer_kernel(x_ref,
                         wqkv_ref, bqkv_ref,
                         wo_ref, bo_ref,
                         ln1_g_ref, ln1_b_ref,
                         w1_ref, b1_ref, w2_ref, b2_ref,
                         ln2_g_ref, ln2_b_ref,
                         out_ref,
                         *, num_heads, compute_dtype):
    f32 = jnp.float32
    x = x_ref[0]                                    # (S, D)
    S, D = x.shape
    d_k = D // num_heads

    def linear(t, w_ref, b_ref):
        # (rows, in) @ (in, out) + (1, out); accumulate in f32 on the MXU.
        return jnp.dot(t.astype(compute_dtype),
                       w_ref[...].astype(compute_dtype),
                       preferred_element_type=f32) + b_ref[...]

    xin = x.astype(compute_dtype)

    # --- multi-head self attention (fused QKV projection, heads batched) ---
    qkv = linear(xin, wqkv_ref, bqkv_ref)           # (S, 3D), one MXU pass
    q = qkv[:, 0 * D:1 * D]
    k = qkv[:, 1 * D:2 * D]
    v = qkv[:, 2 * D:3 * D]

    def split_heads(t):                             # (S, D) -> (H, S, d_k)
        return jnp.stack(
            [t[:, h * d_k:(h + 1) * d_k] for h in range(num_heads)], axis=0)

    scale = 1.0 / math.sqrt(d_k)
    qh = (split_heads(q) * scale).astype(compute_dtype)   # scale Q, not scores
    kh = split_heads(k).astype(compute_dtype)
    vh = split_heads(v).astype(compute_dtype)

    # Batched over heads, contracting d_k directly: no explicit k transpose.
    scores = jnp.einsum("hqd,hkd->hqk", qh, kh,
                        preferred_element_type=f32)                # (H, S, S)
    scores = scores - jnp.max(scores, axis=-1, keepdims=True)
    p = jnp.exp(scores)
    denom = jnp.sum(p, axis=-1, keepdims=True)
    attn = p * pl.reciprocal(denom, approx=True)                   # softmax

    ctx = jnp.einsum("hqk,hkd->hqd", attn.astype(compute_dtype), vh,
                     preferred_element_type=f32)                   # (H, S, d_k)
    # Merge heads back onto the lane axis, then one full-width output proj.
    context = jnp.concatenate([ctx[h] for h in range(num_heads)], axis=-1)
    attn_out = linear(context, wo_ref, bo_ref)                     # (S, D)

    def layernorm(t, g_ref, b_ref):
        mean = jnp.mean(t, axis=-1, keepdims=True)
        var = jnp.mean((t - mean) ** 2, axis=-1, keepdims=True)    # biased (PyTorch LN)
        return (t - mean) * jax.lax.rsqrt(var + 1e-5) * g_ref[...] + b_ref[...]

    # residual + norm1 (kept in f32)
    x1 = layernorm(x.astype(f32) + attn_out, ln1_g_ref, ln1_b_ref)

    # --- position-wise feed forward ---------------------------------------
    h1 = linear(x1, w1_ref, b1_ref)
    # exact (erf-based) GELU, matching F.gelu default
    h1 = 0.5 * h1 * (1.0 + jax.lax.erf(h1 * (1.0 / math.sqrt(2.0))))
    ff = linear(h1, w2_ref, b2_ref)

    # residual + norm2
    out_ref[0] = layernorm(x1 + ff, ln2_g_ref, ln2_b_ref).astype(out_ref.dtype)


def encoder_layer(x, params, num_heads, compute_dtype=jnp.float32):
    """Fused encoder layer. `compute_dtype=jnp.bfloat16` feeds the MXU with
    bf16 (f32 accumulation) on v6e/v7x; default f32 bit-matches PyTorch."""
    B, S, D = x.shape
    d_ff = params["w1"].shape[1]

    # Fuse the three projection weights host-side: one (D, 3D) matmul on-chip.
    wqkv = jnp.concatenate([params["wq"], params["wk"], params["wv"]], axis=1)
    bqkv = jnp.concatenate([params["bq"], params["bk"], params["bv"]], axis=1)

    const2d = lambda shape: pl.BlockSpec(shape, lambda b: (0, 0))

    in_specs = [
        pl.BlockSpec((1, S, D), lambda b: (b, 0, 0)),   # x
        const2d((D, 3 * D)), const2d((1, 3 * D)),       # fused wqkv, bqkv
        const2d((D, D)), const2d((1, D)),               # wo, bo
        const2d((1, D)), const2d((1, D)),               # ln1 gamma, beta
        const2d((D, d_ff)), const2d((1, d_ff)),         # w1, b1
        const2d((d_ff, D)), const2d((1, D)),            # w2, b2
        const2d((1, D)), const2d((1, D)),               # ln2 gamma, beta
    ]

    # Advisory cost model for the XLA scheduler.
    flops = 2 * B * S * (4 * D * D + 2 * S * D + 2 * D * d_ff)
    transcendentals = B * S * (num_heads * S + d_ff) + B * num_heads * S + 2 * B * S
    bytes_accessed = 4 * (2 * B * S * D                 # activations in/out
                          + 4 * D * D + 2 * D * d_ff    # weight matrices
                          + 7 * D + d_ff)               # biases + LN params

    return pl.pallas_call(
        partial(encoder_layer_kernel, num_heads=num_heads,
                compute_dtype=compute_dtype),
        out_shape=jax.ShapeDtypeStruct((B, S, D), jnp.float32),
        grid_spec=pltpu.PrefetchScalarGridSpec(
            num_scalar_prefetch=0,
            grid=(B,),
            in_specs=in_specs,
            out_specs=pl.BlockSpec((1, S, D), lambda b: (b, 0, 0)),
        ),
        compiler_params=pltpu.CompilerParams(
            dimension_semantics=("parallel",),          # megacore / 2-TC shard over batch
            vmem_limit_bytes=64 * 1024 * 1024),
        cost_estimate=pl.CostEstimate(
            flops=flops,
            transcendentals=transcendentals,
            bytes_accessed=bytes_accessed),
    )(x,
      wqkv, bqkv,
      params["wo"], params["bo"],
      params["ln1_g"], params["ln1_b"],
      params["w1"], params["b1"], params["w2"], params["b2"],
      params["ln2_g"], params["ln2_b"])


def encoder_layer_ref(x, params, num_heads):
    """Pure-JAX reference mirroring the PyTorch forward (eval mode)."""
    B, S, D = x.shape
    d_k = D // num_heads

    def lin(v, w, b):
        return v @ w + b

    q = lin(x, params["wq"], params["bq"]).reshape(B, S, num_heads, d_k).transpose(0, 2, 1, 3)
    k = lin(x, params["wk"], params["bk"]).reshape(B, S, num_heads, d_k).transpose(0, 2, 1, 3)
    v = lin(x, params["wv"], params["bv"]).reshape(B, S, num_heads, d_k).transpose(0, 2, 1, 3)
    scores = jnp.einsum("bhqd,bhkd->bhqk", q, k) / math.sqrt(d_k)
    attn = jax.nn.softmax(scores, axis=-1)
    ctx = jnp.einsum("bhqk,bhkd->bhqd", attn, v).transpose(0, 2, 1, 3).reshape(B, S, D)
    attn_out = lin(ctx, params["wo"], params["bo"])

    def ln(v, g, b):
        m = jnp.mean(v, axis=-1, keepdims=True)
        var = jnp.mean((v - m) ** 2, axis=-1, keepdims=True)
        return (v - m) / jnp.sqrt(var + 1e-5) * g + b

    x1 = ln(x + attn_out, params["ln1_g"], params["ln1_b"])
    h1 = lin(x1, params["w1"], params["b1"])
    h1 = 0.5 * h1 * (1.0 + jax.lax.erf(h1 / math.sqrt(2.0)))
    ff = lin(h1, params["w2"], params["b2"])
    return ln(x1 + ff, params["ln2_g"], params["ln2_b"])


if __name__ == "__main__":
    B, S, D, H, D_FF = 2, 8, 32, 4, 64

    key = jax.random.PRNGKey(0)
    keys = jax.random.split(key, 16)
    s = 0.1
    params = {
        "wq": jax.random.normal(keys[0], (D, D), jnp.float32) * s,
        "bq": jax.random.normal(keys[1], (1, D), jnp.float32) * s,
        "wk": jax.random.normal(keys[2], (D, D), jnp.float32) * s,
        "bk": jax.random.normal(keys[3], (1, D), jnp.float32) * s,
        "wv": jax.random.normal(keys[4], (D, D), jnp.float32) * s,
        "bv": jax.random.normal(keys[5], (1, D), jnp.float32) * s,
        "wo": jax.random.normal(keys[6], (D, D), jnp.float32) * s,
        "bo": jax.random.normal(keys[7], (1, D), jnp.float32) * s,
        "ln1_g": jnp.ones((1, D), jnp.float32),
        "ln1_b": jnp.zeros((1, D), jnp.float32),
        "w1": jax.random.normal(keys[8], (D, D_FF), jnp.float32) * s,
        "b1": jax.random.normal(keys[9], (1, D_FF), jnp.float32) * s,
        "w2": jax.random.normal(keys[10], (D_FF, D), jnp.float32) * s,
        "b2": jax.random.normal(keys[11], (1, D), jnp.float32) * s,
        "ln2_g": jnp.ones((1, D), jnp.float32),
        "ln2_b": jnp.zeros((1, D), jnp.float32),
    }
    x = jax.random.normal(keys[12], (B, S, D), jnp.float32)

    # f32 MXU path bit-matches the PyTorch/JAX reference at tight tolerance.
    out = encoder_layer(x, params, H, compute_dtype=jnp.float32)
    out = jax.block_until_ready(out)

    ref = encoder_layer_ref(x, params, H)
    assert out.shape == (B, S, D)
    assert jnp.allclose(out, ref, atol=2e-3, rtol=2e-3), "mismatch vs reference"

    print("KERNEL_OK")
</pallas_src>

<mosaic_0001>
module attributes {stable_mosaic.version = 11 : i64} {
  func.func @encoder_layer_kernel(%arg0: i32, %arg1: memref<1x8x32xf32, #tpu.memory_space<vmem>>, %arg2: memref<32x96xf32, #tpu.memory_space<vmem>>, %arg3: memref<1x96xf32, #tpu.memory_space<vmem>>, %arg4: memref<32x32xf32, #tpu.memory_space<vmem>>, %arg5: memref<1x32xf32, #tpu.memory_space<vmem>>, %arg6: memref<1x32xf32, #tpu.memory_space<vmem>>, %arg7: memref<1x32xf32, #tpu.memory_space<vmem>>, %arg8: memref<32x64xf32, #tpu.memory_space<vmem>>, %arg9: memref<1x64xf32, #tpu.memory_space<vmem>>, %arg10: memref<64x32xf32, #tpu.memory_space<vmem>>, %arg11: memref<1x32xf32, #tpu.memory_space<vmem>>, %arg12: memref<1x32xf32, #tpu.memory_space<vmem>>, %arg13: memref<1x32xf32, #tpu.memory_space<vmem>>, %arg14: memref<1x8x32xf32, #tpu.memory_space<vmem>>) attributes {dimension_semantics = [#tpu.dimension_semantics<parallel>], iteration_bounds = array<i64: 2>, scalar_prefetch = 0 : i64, scratch_operands = 0 : i64, tpu.core_type = #tpu.core_type<tc>, window_params = [{transform_indices = @transform_0, window_bounds = array<i64: 1, 8, 32>}, {pipeline_mode = #tpu.pipeline_mode<synchronous>, transform_indices = @transform_1, window_bounds = array<i64: 32, 96>}, {pipeline_mode = #tpu.pipeline_mode<synchronous>, transform_indices = @transform_2, window_bounds = array<i64: 1, 96>}, {pipeline_mode = #tpu.pipeline_mode<synchronous>, transform_indices = @transform_3, window_bounds = array<i64: 32, 32>}, {pipeline_mode = #tpu.pipeline_mode<synchronous>, transform_indices = @transform_4, window_bounds = array<i64: 1, 32>}, {pipeline_mode = #tpu.pipeline_mode<synchronous>, transform_indices = @transform_5, window_bounds = array<i64: 1, 32>}, {pipeline_mode = #tpu.pipeline_mode<synchronous>, transform_indices = @transform_6, window_bounds = array<i64: 1, 32>}, {pipeline_mode = #tpu.pipeline_mode<synchronous>, transform_indices = @transform_7, window_bounds = array<i64: 32, 64>}, {pipeline_mode = #tpu.pipeline_mode<synchronous>, transform_indices = @transform_8, window_bounds = array<i64: 1, 64>}, {pipeline_mode = #tpu.pipeline_mode<synchronous>, transform_indices = @transform_9, window_bounds = array<i64: 64, 32>}, {pipeline_mode = #tpu.pipeline_mode<synchronous>, transform_indices = @transform_10, window_bounds = array<i64: 1, 32>}, {pipeline_mode = #tpu.pipeline_mode<synchronous>, transform_indices = @transform_11, window_bounds = array<i64: 1, 32>}, {pipeline_mode = #tpu.pipeline_mode<synchronous>, transform_indices = @transform_12, window_bounds = array<i64: 1, 32>}, {transform_indices = @transform_13, window_bounds = array<i64: 1, 8, 32>}]} {
    %c0 = arith.constant 0 : index
    %c0_0 = arith.constant 0 : index
    %c0_1 = arith.constant 0 : index
    %0 = vector.load %arg1[%c0, %c0_0, %c0_1] : memref<1x8x32xf32, #tpu.memory_space<vmem>>, vector<1x8x32xf32>
    %1 = vector.shape_cast %0 : vector<1x8x32xf32> to vector<8x32xf32>
    %c0_2 = arith.constant 0 : index
    %c0_3 = arith.constant 0 : index
    %2 = vector.load %arg2[%c0_2, %c0_3] : memref<32x96xf32, #tpu.memory_space<vmem>>, vector<32x96xf32>
    %cst = arith.constant dense<0.000000e+00> : vector<8x96xf32>
    %3 = tpu.matmul %1, %2, %cst {dimension_numbers = #tpu.dot_dimension_numbers<[1], [0], [0], [1], [0, 0, 1, 1], [], []>} : vector<8x32xf32>, vector<32x96xf32>, vector<8x96xf32> -> vector<8x96xf32>
    %c0_4 = arith.constant 0 : index
    %c0_5 = arith.constant 0 : index
    %4 = vector.load %arg3[%c0_4, %c0_5] : memref<1x96xf32, #tpu.memory_space<vmem>>, vector<1x96xf32>
    %5 = vector.broadcast %4 : vector<1x96xf32> to vector<8x96xf32>
    %6 = arith.addf %3, %5 : vector<8x96xf32>
    %7 = vector.extract_strided_slice %6 {offsets = [0, 0], sizes = [8, 32], strides = [1, 1]} : vector<8x96xf32> to vector<8x32xf32>
    %8 = vector.extract_strided_slice %6 {offsets = [0, 32], sizes = [8, 32], strides = [1, 1]} : vector<8x96xf32> to vector<8x32xf32>
    %9 = vector.extract_strided_slice %6 {offsets = [0, 64], sizes = [8, 32], strides = [1, 1]} : vector<8x96xf32> to vector<8x32xf32>
    %10 = vector.extract_strided_slice %7 {offsets = [0, 0], sizes = [8, 8], strides = [1, 1]} : vector<8x32xf32> to vector<8x8xf32>
    %11 = vector.extract_strided_slice %7 {offsets = [0, 8], sizes = [8, 8], strides = [1, 1]} : vector<8x32xf32> to vector<8x8xf32>
    %12 = vector.extract_strided_slice %7 {offsets = [0, 16], sizes = [8, 8], strides = [1, 1]} : vector<8x32xf32> to vector<8x8xf32>
    %13 = vector.extract_strided_slice %7 {offsets = [0, 24], sizes = [8, 8], strides = [1, 1]} : vector<8x32xf32> to vector<8x8xf32>
    %14 = vector.shape_cast %10 : vector<8x8xf32> to vector<1x8x8xf32>
    %15 = vector.shape_cast %11 : vector<8x8xf32> to vector<1x8x8xf32>
    %16 = vector.shape_cast %12 : vector<8x8xf32> to vector<1x8x8xf32>
    %17 = vector.shape_cast %13 : vector<8x8xf32> to vector<1x8x8xf32>
    %18 = tpu.concatenate %14, %15, %16, %17 in 0 : vector<1x8x8xf32>, vector<1x8x8xf32>, vector<1x8x8xf32>, vector<1x8x8xf32> -> vector<4x8x8xf32>
    %cst_6 = arith.constant 0.353553385 : f32
    %19 = vector.broadcast %cst_6 : f32 to vector<4x8x8xf32>
    %20 = arith.mulf %18, %19 : vector<4x8x8xf32>
    %21 = vector.extract_strided_slice %8 {offsets = [0, 0], sizes = [8, 8], strides = [1, 1]} : vector<8x32xf32> to vector<8x8xf32>
    %22 = vector.extract_strided_slice %8 {offsets = [0, 8], sizes = [8, 8], strides = [1, 1]} : vector<8x32xf32> to vector<8x8xf32>
    %23 = vector.extract_strided_slice %8 {offsets = [0, 16], sizes = [8, 8], strides = [1, 1]} : vector<8x32xf32> to vector<8x8xf32>
    %24 = vector.extract_strided_slice %8 {offsets = [0, 24], sizes = [8, 8], strides = [1, 1]} : vector<8x32xf32> to vector<8x8xf32>
    %25 = vector.shape_cast %21 : vector<8x8xf32> to vector<1x8x8xf32>
    %26 = vector.shape_cast %22 : vector<8x8xf32> to vector<1x8x8xf32>
    %27 = vector.shape_cast %23 : vector<8x8xf32> to vector<1x8x8xf32>
    %28 = vector.shape_cast %24 : vector<8x8xf32> to vector<1x8x8xf32>
    %29 = tpu.concatenate %25, %26, %27, %28 in 0 : vector<1x8x8xf32>, vector<1x8x8xf32>, vector<1x8x8xf32>, vector<1x8x8xf32> -> vector<4x8x8xf32>
    %30 = vector.extract_strided_slice %9 {offsets = [0, 0], sizes = [8, 8], strides = [1, 1]} : vector<8x32xf32> to vector<8x8xf32>
    %31 = vector.extract_strided_slice %9 {offsets = [0, 8], sizes = [8, 8], strides = [1, 1]} : vector<8x32xf32> to vector<8x8xf32>
    %32 = vector.extract_strided_slice %9 {offsets = [0, 16], sizes = [8, 8], strides = [1, 1]} : vector<8x32xf32> to vector<8x8xf32>
    %33 = vector.extract_strided_slice %9 {offsets = [0, 24], sizes = [8, 8], strides = [1, 1]} : vector<8x32xf32> to vector<8x8xf32>
    %34 = vector.shape_cast %30 : vector<8x8xf32> to vector<1x8x8xf32>
    %35 = vector.shape_cast %31 : vector<8x8xf32> to vector<1x8x8xf32>
    %36 = vector.shape_cast %32 : vector<8x8xf32> to vector<1x8x8xf32>
    %37 = vector.shape_cast %33 : vector<8x8xf32> to vector<1x8x8xf32>
    %38 = tpu.concatenate %34, %35, %36, %37 in 0 : vector<1x8x8xf32>, vector<1x8x8xf32>, vector<1x8x8xf32>, vector<1x8x8xf32> -> vector<4x8x8xf32>
    "tpu.trace_start"() <{level = 10 : i32, message = "hqd,hkd->hqk"}> : () -> ()
    %cst_7 = arith.constant dense<0.000000e+00> : vector<4x8x8xf32>
    %39 = tpu.matmul %20, %29, %cst_7 {dimension_numbers = #tpu.dot_dimension_numbers<[2], [2], [1], [1], [0, 0, 0, 1, 1, 1], [0], [0]>} : vector<4x8x8xf32>, vector<4x8x8xf32>, vector<4x8x8xf32> -> vector<4x8x8xf32>
    "tpu.trace_stop"() : () -> ()
    %cst_8 = arith.constant dense<0xFF800000> : vector<4x8xf32>
    %40 = vector.multi_reduction <maximumf>, %39, %cst_8 [2] : vector<4x8x8xf32> to vector<4x8xf32>
    %41 = vector.shape_cast %40 : vector<4x8xf32> to vector<4x8x1xf32>
    %42 = vector.broadcast %41 : vector<4x8x1xf32> to vector<4x8x8xf32>
    %43 = arith.subf %39, %42 : vector<4x8x8xf32>
    %44 = math.exp %43 : vector<4x8x8xf32>
    %cst_9 = arith.constant dense<0.000000e+00> : vector<4x8xf32>
    %45 = vector.multi_reduction <add>, %44, %cst_9 [2] : vector<4x8x8xf32> to vector<4x8xf32>
    %46 = vector.shape_cast %45 : vector<4x8xf32> to vector<4x8x1xf32>
    %47 = tpu.reciprocal %46 {approx = true} : vector<4x8x1xf32> -> vector<4x8x1xf32>
    %48 = vector.broadcast %47 : vector<4x8x1xf32> to vector<4x8x8xf32>
    %49 = arith.mulf %44, %48 : vector<4x8x8xf32>
    "tpu.trace_start"() <{level = 10 : i32, message = "hqk,hkd->hqd"}> : () -> ()
    %cst_10 = arith.constant dense<0.000000e+00> : vector<4x8x8xf32>
    %50 = tpu.matmul %49, %38, %cst_10 {dimension_numbers = #tpu.dot_dimension_numbers<[2], [1], [1], [2], [0, 0, 0, 1, 1, 2], [0], [0]>} : vector<4x8x8xf32>, vector<4x8x8xf32>, vector<4x8x8xf32> -> vector<4x8x8xf32>
    "tpu.trace_stop"() : () -> ()
    %51 = vector.extract_strided_slice %50 {offsets = [0, 0, 0], sizes = [1, 8, 8], strides = [1, 1, 1]} : vector<4x8x8xf32> to vector<1x8x8xf32>
    %52 = vector.shape_cast %51 : vector<1x8x8xf32> to vector<8x8xf32>
    %53 = vector.extract_strided_slice %50 {offsets = [1, 0, 0], sizes = [1, 8, 8], strides = [1, 1, 1]} : vector<4x8x8xf32> to vector<1x8x8xf32>
    %54 = vector.shape_cast %53 : vector<1x8x8xf32> to vector<8x8xf32>
    %55 = vector.extract_strided_slice %50 {offsets = [2, 0, 0], sizes = [1, 8, 8], strides = [1, 1, 1]} : vector<4x8x8xf32> to vector<1x8x8xf32>
    %56 = vector.shape_cast %55 : vector<1x8x8xf32> to vector<8x8xf32>
    %57 = vector.extract_strided_slice %50 {offsets = [3, 0, 0], sizes = [1, 8, 8], strides = [1, 1, 1]} : vector<4x8x8xf32> to vector<1x8x8xf32>
    %58 = vector.shape_cast %57 : vector<1x8x8xf32> to vector<8x8xf32>
    %59 = tpu.concatenate %52, %54, %56, %58 in 1 : vector<8x8xf32>, vector<8x8xf32>, vector<8x8xf32>, vector<8x8xf32> -> vector<8x32xf32>
    %c0_11 = arith.constant 0 : index
    %c0_12 = arith.constant 0 : index
    %60 = vector.load %arg4[%c0_11, %c0_12] : memref<32x32xf32, #tpu.memory_space<vmem>>, vector<32x32xf32>
    %cst_13 = arith.constant dense<0.000000e+00> : vector<8x32xf32>
    %61 = tpu.matmul %59, %60, %cst_13 {dimension_numbers = #tpu.dot_dimension_numbers<[1], [0], [0], [1], [0, 0, 1, 1], [], []>} : vector<8x32xf32>, vector<32x32xf32>, vector<8x32xf32> -> vector<8x32xf32>
    %c0_14 = arith.constant 0 : index
    %c0_15 = arith.constant 0 : index
    %62 = vector.load %arg5[%c0_14, %c0_15] : memref<1x32xf32, #tpu.memory_space<vmem>>, vector<1x32xf32>
    %63 = vector.broadcast %62 : vector<1x32xf32> to vector<8x32xf32>
    %64 = arith.addf %61, %63 : vector<8x32xf32>
    %65 = arith.addf %1, %64 : vector<8x32xf32>
    %cst_16 = arith.constant dense<0.000000e+00> : vector<8xf32>
    %66 = vector.multi_reduction <add>, %65, %cst_16 [1] : vector<8x32xf32> to vector<8xf32>
    %67 = vector.shape_cast %66 : vector<8xf32> to vector<8x1xf32>
    %cst_17 = arith.constant 3.200000e+01 : f32
    %68 = vector.broadcast %cst_17 : f32 to vector<8x1xf32>
    %69 = arith.divf %67, %68 : vector<8x1xf32>
    %70 = vector.broadcast %69 : vector<8x1xf32> to vector<8x32xf32>
    %71 = arith.subf %65, %70 : vector<8x32xf32>
    %72 = arith.mulf %71, %71 : vector<8x32xf32>
    %cst_18 = arith.constant dense<0.000000e+00> : vector<8xf32>
    %73 = vector.multi_reduction <add>, %72, %cst_18 [1] : vector<8x32xf32> to vector<8xf32>
    %74 = vector.shape_cast %73 : vector<8xf32> to vector<8x1xf32>
    %cst_19 = arith.constant 3.200000e+01 : f32
    %75 = vector.broadcast %cst_19 : f32 to vector<8x1xf32>
    %76 = arith.divf %74, %75 : vector<8x1xf32>
    %77 = vector.broadcast %69 : vector<8x1xf32> to vector<8x32xf32>
    %78 = arith.subf %65, %77 : vector<8x32xf32>
    %cst_20 = arith.constant 9.99999974E-6 : f32
    %79 = vector.broadcast %cst_20 : f32 to vector<8x1xf32>
    %80 = arith.addf %76, %79 : vector<8x1xf32>
    %81 = math.rsqrt %80 : vector<8x1xf32>
    %82 = vector.broadcast %81 : vector<8x1xf32> to vector<8x32xf32>
    %83 = arith.mulf %78, %82 : vector<8x32xf32>
    %c0_21 = arith.constant 0 : index
    %c0_22 = arith.constant 0 : index
    %84 = vector.load %arg6[%c0_21, %c0_22] : memref<1x32xf32, #tpu.memory_space<vmem>>, vector<1x32xf32>
    %85 = vector.broadcast %84 : vector<1x32xf32> to vector<8x32xf32>
    %86 = arith.mulf %83, %85 : vector<8x32xf32>
    %c0_23 = arith.constant 0 : index
    %c0_24 = arith.constant 0 : index
    %87 = vector.load %arg7[%c0_23, %c0_24] : memref<1x32xf32, #tpu.memory_space<vmem>>, vector<1x32xf32>
    %88 = vector.broadcast %87 : vector<1x32xf32> to vector<8x32xf32>
    %89 = arith.addf %86, %88 : vector<8x32xf32>
    %c0_25 = arith.constant 0 : index
    %c0_26 = arith.constant 0 : index
    %90 = vector.load %arg8[%c0_25, %c0_26] : memref<32x64xf32, #tpu.memory_space<vmem>>, vector<32x64xf32>
    %cst_27 = arith.constant dense<0.000000e+00> : vector<8x64xf32>
    %91 = tpu.matmul %89, %90, %cst_27 {dimension_numbers = #tpu.dot_dimension_numbers<[1], [0], [0], [1], [0, 0, 1, 1], [], []>} : vector<8x32xf32>, vector<32x64xf32>, vector<8x64xf32> -> vector<8x64xf32>
    %c0_28 = arith.constant 0 : index
    %c0_29 = arith.constant 0 : index
    %92 = vector.load %arg9[%c0_28, %c0_29] : memref<1x64xf32, #tpu.memory_space<vmem>>, vector<1x64xf32>
    %93 = vector.broadcast %92 : vector<1x64xf32> to vector<8x64xf32>
    %94 = arith.addf %91, %93 : vector<8x64xf32>
    %cst_30 = arith.constant 5.000000e-01 : f32
    %95 = vector.broadcast %cst_30 : f32 to vector<8x64xf32>
    %96 = arith.mulf %95, %94 : vector<8x64xf32>
    %cst_31 = arith.constant 0.707106769 : f32
    %97 = vector.broadcast %cst_31 : f32 to vector<8x64xf32>
    %98 = arith.mulf %94, %97 : vector<8x64xf32>
    %99 = math.erf %98 : vector<8x64xf32>
    %cst_32 = arith.constant 1.000000e+00 : f32
    %100 = vector.broadcast %cst_32 : f32 to vector<8x64xf32>
    %101 = arith.addf %100, %99 : vector<8x64xf32>
    %102 = arith.mulf %96, %101 : vector<8x64xf32>
    %c0_33 = arith.constant 0 : index
    %c0_34 = arith.constant 0 : index
    %103 = vector.load %arg10[%c0_33, %c0_34] : memref<64x32xf32, #tpu.memory_space<vmem>>, vector<64x32xf32>
    %cst_35 = arith.constant dense<0.000000e+00> : vector<8x32xf32>
    %104 = tpu.matmul %102, %103, %cst_35 {dimension_numbers = #tpu.dot_dimension_numbers<[1], [0], [0], [1], [0, 0, 1, 1], [], []>} : vector<8x64xf32>, vector<64x32xf32>, vector<8x32xf32> -> vector<8x32xf32>
    %c0_36 = arith.constant 0 : index
    %c0_37 = arith.constant 0 : index
    %105 = vector.load %arg11[%c0_36, %c0_37] : memref<1x32xf32, #tpu.memory_space<vmem>>, vector<1x32xf32>
    %106 = vector.broadcast %105 : vector<1x32xf32> to vector<8x32xf32>
    %107 = arith.addf %104, %106 : vector<8x32xf32>
    %108 = arith.addf %89, %107 : vector<8x32xf32>
    %cst_38 = arith.constant dense<0.000000e+00> : vector<8xf32>
    %109 = vector.multi_reduction <add>, %108, %cst_38 [1] : vector<8x32xf32> to vector<8xf32>
    %110 = vector.shape_cast %109 : vector<8xf32> to vector<8x1xf32>
    %cst_39 = arith.constant 3.200000e+01 : f32
    %111 = vector.broadcast %cst_39 : f32 to vector<8x1xf32>
    %112 = arith.divf %110, %111 : vector<8x1xf32>
    %113 = vector.broadcast %112 : vector<8x1xf32> to vector<8x32xf32>
    %114 = arith.subf %108, %113 : vector<8x32xf32>
    %115 = arith.mulf %114, %114 : vector<8x32xf32>
    %cst_40 = arith.constant dense<0.000000e+00> : vector<8xf32>
    %116 = vector.multi_reduction <add>, %115, %cst_40 [1] : vector<8x32xf32> to vector<8xf32>
    %117 = vector.shape_cast %116 : vector<8xf32> to vector<8x1xf32>
    %cst_41 = arith.constant 3.200000e+01 : f32
    %118 = vector.broadcast %cst_41 : f32 to vector<8x1xf32>
    %119 = arith.divf %117, %118 : vector<8x1xf32>
    %120 = vector.broadcast %112 : vector<8x1xf32> to vector<8x32xf32>
    %121 = arith.subf %108, %120 : vector<8x32xf32>
    %cst_42 = arith.constant 9.99999974E-6 : f32
    %122 = vector.broadcast %cst_42 : f32 to vector<8x1xf32>
    %123 = arith.addf %119, %122 : vector<8x1xf32>
    %124 = math.rsqrt %123 : vector<8x1xf32>
    %125 = vector.broadcast %124 : vector<8x1xf32> to vector<8x32xf32>
    %126 = arith.mulf %121, %125 : vector<8x32xf32>
    %c0_43 = arith.constant 0 : index
    %c0_44 = arith.constant 0 : index
    %127 = vector.load %arg12[%c0_43, %c0_44] : memref<1x32xf32, #tpu.memory_space<vmem>>, vector<1x32xf32>
    %128 = vector.broadcast %127 : vector<1x32xf32> to vector<8x32xf32>
    %129 = arith.mulf %126, %128 : vector<8x32xf32>
    %c0_45 = arith.constant 0 : index
    %c0_46 = arith.constant 0 : index
    %130 = vector.load %arg13[%c0_45, %c0_46] : memref<1x32xf32, #tpu.memory_space<vmem>>, vector<1x32xf32>
    %131 = vector.broadcast %130 : vector<1x32xf32> to vector<8x32xf32>
    %132 = arith.addf %129, %131 : vector<8x32xf32>
    %c0_47 = arith.constant 0 : index
    %c0_48 = arith.constant 0 : index
    %c0_49 = arith.constant 0 : index
    %133 = vector.load %arg14[%c0_47, %c0_48, %c0_49] : memref<1x8x32xf32, #tpu.memory_space<vmem>>, vector<1x8x32xf32>
    %134 = vector.shape_cast %133 : vector<1x8x32xf32> to vector<8x32xf32>
    %135 = vector.shape_cast %132 : vector<8x32xf32> to vector<1x8x32xf32>
    tpu.vector_store %arg14[%c0_47, %c0_48, %c0_49], %135 {strides = array<i32>} : memref<1x8x32xf32, #tpu.memory_space<vmem>>, vector<1x8x32xf32>,
    return
  }
  func.func @transform_0(%arg0: i32) -> (i32, i32, i32) {
    %c0_i32 = arith.constant 0 : i32
    %c0_i32_0 = arith.constant 0 : i32
    %c0_i32_1 = arith.constant 0 : i32
    return %arg0, %c0_i32, %c0_i32_0 : i32, i32, i32
  }
  func.func @transform_1(%arg0: i32) -> (i32, i32) {
    %c0_i32 = arith.constant 0 : i32
    %c0_i32_0 = arith.constant 0 : i32
    %c0_i32_1 = arith.constant 0 : i32
    return %c0_i32, %c0_i32_0 : i32, i32
  }
  func.func @transform_2(%arg0: i32) -> (i32, i32) {
    %c0_i32 = arith.constant 0 : i32
    %c0_i32_0 = arith.constant 0 : i32
    %c0_i32_1 = arith.constant 0 : i32
    return %c0_i32, %c0_i32_0 : i32, i32
  }
  func.func @transform_3(%arg0: i32) -> (i32, i32) {
    %c0_i32 = arith.constant 0 : i32
    %c0_i32_0 = arith.constant 0 : i32
    %c0_i32_1 = arith.constant 0 : i32
    return %c0_i32, %c0_i32_0 : i32, i32
  }
  func.func @transform_4(%arg0: i32) -> (i32, i32) {
    %c0_i32 = arith.constant 0 : i32
    %c0_i32_0 = arith.constant 0 : i32
    %c0_i32_1 = arith.constant 0 : i32
    return %c0_i32, %c0_i32_0 : i32, i32
  }
  func.func @transform_5(%arg0: i32) -> (i32, i32) {
    %c0_i32 = arith.constant 0 : i32
    %c0_i32_0 = arith.constant 0 : i32
    %c0_i32_1 = arith.constant 0 : i32
    return %c0_i32, %c0_i32_0 : i32, i32
  }
  func.func @transform_6(%arg0: i32) -> (i32, i32) {
    %c0_i32 = arith.constant 0 : i32
    %c0_i32_0 = arith.constant 0 : i32
    %c0_i32_1 = arith.constant 0 : i32
    return %c0_i32, %c0_i32_0 : i32, i32
  }
  func.func @transform_7(%arg0: i32) -> (i32, i32) {
    %c0_i32 = arith.constant 0 : i32
    %c0_i32_0 = arith.constant 0 : i32
    %c0_i32_1 = arith.constant 0 : i32
    return %c0_i32, %c0_i32_0 : i32, i32
  }
  func.func @transform_8(%arg0: i32) -> (i32, i32) {
    %c0_i32 = arith.constant 0 : i32
    %c0_i32_0 = arith.constant 0 : i32
    %c0_i32_1 = arith.constant 0 : i32
    return %c0_i32, %c0_i32_0 : i32, i32
  }
  func.func @transform_9(%arg0: i32) -> (i32, i32) {
    %c0_i32 = arith.constant 0 : i32
    %c0_i32_0 = arith.constant 0 : i32
    %c0_i32_1 = arith.constant 0 : i32
    return %c0_i32, %c0_i32_0 : i32, i32
  }
  func.func @transform_10(%arg0: i32) -> (i32, i32) {
    %c0_i32 = arith.constant 0 : i32
    %c0_i32_0 = arith.constant 0 : i32
    %c0_i32_1 = arith.constant 0 : i32
    return %c0_i32, %c0_i32_0 : i32, i32
  }
  func.func @transform_11(%arg0: i32) -> (i32, i32) {
    %c0_i32 = arith.constant 0 : i32
    %c0_i32_0 = arith.constant 0 : i32
    %c0_i32_1 = arith.constant 0 : i32
    return %c0_i32, %c0_i32_0 : i32, i32
  }
  func.func @transform_12(%arg0: i32) -> (i32, i32) {
    %c0_i32 = arith.constant 0 : i32
    %c0_i32_0 = arith.constant 0 : i32
    %c0_i32_1 = arith.constant 0 : i32
    return %c0_i32, %c0_i32_0 : i32, i32
  }
  func.func @transform_13(%arg0: i32) -> (i32, i32, i32) {
    %c0_i32 = arith.constant 0 : i32
    %c0_i32_0 = arith.constant 0 : i32
    %c0_i32_1 = arith.constant 0 : i32
    return %arg0, %c0_i32, %c0_i32_0 : i32, i32, i32
  }
}

</mosaic_0001>

<llo_original>
// kernel: tpu_custom_call.1
$region0: #{tpu_custom_call.1}
  #allocation0 [shape = 'u32[]', space=smem, size = 0x4, offset = 0x4, fixed_abs, tag = 'smem constant byte address 0x4 - core index']
  #allocation1 [shape = 'u32[144,128]{1,0:T(1,128)}', space=vmem, size = 0x12000, scoped, tag = 'internal scratch']
  %s0 = inlined_call_operand.hbm [shape: f32[2,8,32], index: 0, kind: input, shape index: {}]
  %s1 = inlined_call_operand.hbm [shape: f32[32,96], index: 1, kind: input, shape index: {}]
  %s2 = inlined_call_operand.hbm [shape: f32[1,96], index: 2, kind: input, shape index: {}]
  %s3 = inlined_call_operand.hbm [shape: f32[32,32], index: 3, kind: input, shape index: {}]
  %s4 = inlined_call_operand.hbm [shape: f32[1,32], index: 4, kind: input, shape index: {}]
  %s5 = inlined_call_operand.hbm [shape: f32[1,32], index: 5, kind: input, shape index: {}]
  %s6 = inlined_call_operand.hbm [shape: f32[1,32], index: 6, kind: input, shape index: {}]
  %s7 = inlined_call_operand.hbm [shape: f32[32,64], index: 7, kind: input, shape index: {}]
  %s8 = inlined_call_operand.hbm [shape: f32[1,64], index: 8, kind: input, shape index: {}]
  %s9 = inlined_call_operand.hbm [shape: f32[64,32], index: 9, kind: input, shape index: {}]
  %s10 = inlined_call_operand.hbm [shape: f32[1,32], index: 10, kind: input, shape index: {}]
  %s11 = inlined_call_operand.hbm [shape: f32[1,32], index: 11, kind: input, shape index: {}]
  %s12 = inlined_call_operand.hbm [shape: f32[1,32], index: 12, kind: input, shape index: {}]
  %s13 = inlined_call_operand.hbm [shape: f32[2,8,32], index: 13, kind: output, shape index: {}]
  %s14 = sld [smem:[#allocation0]]
  $region137: #{tpu_custom_call.1} parent=0
    _
  %s16 = ssub.s32 1, %s14
  %s17 = scalar_select 0, %s16, %s14
  $region1: #{tpu_custom_call.1} parent=0
    #allocation2 [shape = 'u8[8192]{0}', space=vmem, size = 0x2000, scoped, tag = 'input window, operand 0']
    #allocation3 [shape = 's32[2]{0}', space=sflag, size = 0x8, scoped, tag = 'scoped memory for tpu_custom_call.1']
    #allocation4 [shape = 's32[2]{0}', space=sflag, size = 0x8, scoped, tag = 'scoped memory for tpu_custom_call.1']
    #allocation5 [shape = 'u8[16384]{0}', space=vmem, size = 0x4000, scoped, tag = 'input window, operand 1, single buffered']
    #allocation6 [shape = 's32[1]{0}', space=sflag, size = 0x4, scoped, tag = 'scoped memory for tpu_custom_call.1']
    #allocation7 [shape = 'u8[512]{0}', space=vmem, size = 0x400, scoped, tag = 'input window, operand 2, single buffered']
    #allocation8 [shape = 'u8[16384]{0}', space=vmem, size = 0x4000, scoped, tag = 'input window, operand 3, single buffered']
    #allocation9 [shape = 's32[1]{0}', space=sflag, size = 0x4, scoped, tag = 'scoped memory for tpu_custom_call.1']
    #allocation10 [shape = 'u8[512]{0}', space=vmem, size = 0x400, scoped, tag = 'input window, operand 4, single buffered']
    #allocation11 [shape = 'u8[512]{0}', space=vmem, size = 0x400, scoped, tag = 'input window, operand 5, single buffered']
    #allocation12 [shape = 's32[1]{0}', space=sflag, size = 0x4, scoped, tag = 'scoped memory for tpu_custom_call.1']
    #allocation13 [shape = 'u8[512]{0}', space=vmem, size = 0x400, scoped, tag = 'input window, operand 6, single buffered']
    #allocation14 [shape = 'u8[16384]{0}', space=vmem, size = 0x4000, scoped, tag = 'input window, operand 7, single buffered']
    #allocation15 [shape = 's32[1]{0}', space=sflag, size = 0x4, scoped, tag = 'scoped memory for tpu_custom_call.1']
    #allocation16 [shape = 'u8[512]{0}', space=vmem, size = 0x400, scoped, tag = 'input window, operand 8, single buffered']
    #allocation17 [shape = 'u8[32768]{0}', space=vmem, size = 0x8000, scoped, tag = 'input window, operand 9, single buffered']
    #allocation18 [shape = 's32[1]{0}', space=sflag, size = 0x4, scoped, tag = 'scoped memory for tpu_custom_call.1']
    #allocation19 [shape = 'u8[512]{0}', space=vmem, size = 0x400, scoped, tag = 'input window, operand 10, single buffered']
    #allocation20 [shape = 'u8[512]{0}', space=vmem, size = 0x400, scoped, tag = 'input window, operand 11, single buffered']
    #allocation21 [shape = 's32[1]{0}', space=sflag, size = 0x4, scoped, tag = 'scoped memory for tpu_custom_call.1']
    #allocation22 [shape = 'u8[512]{0}', space=vmem, size = 0x400, scoped, tag = 'input window, operand 12, single buffered']
    #allocation23 [shape = 'u8[8192]{0}', space=vmem, size = 0x2000, scoped, tag = 'output window, operand 0']
    %18 = vsyncpa [#allocation3], 0
    %s19 = scalar_lea.sflag [#allocation3], 1
    %20 = vsyncpa %s19, 0
    %21 = vsyncpa [#allocation6], 0
    %22 = vsyncpa [#allocation9], 0
    %23 = vsyncpa [#allocation12], 0
    %24 = vsyncpa [#allocation15], 0
    %25 = vsyncpa [#allocation18], 0
    %26 = vsyncpa [#allocation21], 0
    %27 = vsyncpa [#allocation4], 0
    %s28 = scalar_lea.sflag [#allocation4], 1
    %29 = vsyncpa %s28, 0
    loop: start=0, step=1, limit=4
    $region2: #{tpu_custom_call.1} parent=1 // loop_pre_header
      _
    $region3: #{tpu_custom_call.1} parent=1 // loop_header
      %s31 = sphi 0, %s35
      %p32 = scmp.ge.s32.totalorder %s31, 4
      %s41 = sphi 0, %s43
      %s44 = sphi 0, %s41
      %s45 = sphi 0, %s44
      %s61 = sphi 0, %s45
      %s65 = sphi 0, %s65
      %s67 = sphi 0, %s65
      %s68 = sphi 0, %s67
      %s82 = sphi 0, %s68
      %s86 = sphi 0, %s86
      %s88 = sphi 0, %s86
      %s89 = sphi 0, %s88
      %s103 = sphi 0, %s89
      %s107 = sphi 0, %s107
      %s109 = sphi 0, %s107
      %s110 = sphi 0, %s109
      %s124 = sphi 0, %s110
      %s128 = sphi 0, %s128
      %s130 = sphi 0, %s128
      %s131 = sphi 0, %s130
      %s145 = sphi 0, %s131
      %s149 = sphi 0, %s149
      %s151 = sphi 0, %s149
      %s152 = sphi 0, %s151
      %s166 = sphi 0, %s152
      %s170 = sphi 0, %s170
      %s172 = sphi 0, %s170
      %s173 = sphi 0, %s172
      %s187 = sphi 0, %s173
      %s191 = sphi 0, %s191
      %s193 = sphi 0, %s191
      %s194 = sphi 0, %s193
      %s208 = sphi 0, %s194
      %s212 = sphi 0, %s212
      %s214 = sphi 0, %s212
      %s215 = sphi 0, %s214
      %s229 = sphi 0, %s215
      %s233 = sphi 0, %s233
      %s235 = sphi 0, %s233
      %s236 = sphi 0, %s235
      %s250 = sphi 0, %s236
      %s254 = sphi 0, %s254
      %s256 = sphi 0, %s254
      %s257 = sphi 0, %s256
      %s271 = sphi 0, %s257
      %s275 = sphi 0, %s275
      %s277 = sphi 0, %s275
      %s278 = sphi 0, %s277
      %s292 = sphi 0, %s278
      %s296 = sphi 0, %s296
      %s298 = sphi 0, %s296
      %s299 = sphi 0, %s298
      %s313 = sphi 0, %s299
      %s319 = sphi 0, %s321
      %s322 = sphi 0, %s319
      %s323 = sphi 0, %s322
      %s339 = sphi 0, %s323
    $region4: #{tpu_custom_call.1} parent=1 // loop_header_branch
      %34 = sbr.rel (%p32) target = $region8
    $region5: #{tpu_custom_call.1} parent=1 // loop_body
      %s36 = ssub.s32 %s31, 1
      %s37 = ssub.s32 %s31, 2
      %s38 = sadd.s32 %s31, 1
      %s39 = ssub.s32 %s31, %s38
      %p40 = scmp.eq.s32.totalorder %s39, 0
      %s42 = sadd.s32 %s41, 1
      %s43 = scalar_select %p40, %s41, %s42
      %p46 = pneg %p40
      %p47 = scmp.eq.s32.totalorder %s31, 1
      %p48 = por %p46, %p47
      %p49 = scmp.ne.s32.totalorder %s41, %s44
      %p50 = scmp.eq.s32.totalorder %s31, 0
      %p51 = por %p49, %p50
      %p52 = scmp.ne.s32.totalorder %s41, %s44
      %p53 = scmp.eq.s32.totalorder %s36, 1
      %p54 = por %p52, %p53
      %p55 = scmp.ne.s32.totalorder %s44, %s45
      %p56 = scmp.eq.s32.totalorder %s36, 0
      %p57 = por %p55, %p56
      %p58 = scmp.ne.s32.totalorder %s44, %s45
      %p59 = scmp.eq.s32.totalorder %s37, 1
      %p60 = por %p58, %p59
      %p62 = scmp.ne.s32.totalorder %s45, %s61
      %p63 = scmp.eq.s32.totalorder %s37, 0
      %p64 = por %p62, %p63
      %s66 = sadd.s32 %s65, 1
      %p69 = scmp.eq.s32.totalorder %s31, 1
      %p70 = scmp.ne.s32.totalorder %s65, %s67
      %p71 = scmp.eq.s32.totalorder %s31, 0
      %p72 = por %p70, %p71
      %p73 = scmp.ne.s32.totalorder %s65, %s67
      %p74 = scmp.eq.s32.totalorder %s36, 1
      %p75 = por %p73, %p74
      %p76 = scmp.ne.s32.totalorder %s67, %s68
      %p77 = scmp.eq.s32.totalorder %s36, 0
      %p78 = por %p76, %p77
      %p79 = scmp.ne.s32.totalorder %s67, %s68
      %p80 = scmp.eq.s32.totalorder %s37, 1
      %p81 = por %p79, %p80
      %p83 = scmp.ne.s32.totalorder %s68, %s82
      %p84 = scmp.eq.s32.totalorder %s37, 0
      %p85 = por %p83, %p84
      %s87 = sadd.s32 %s86, 1
      %p90 = scmp.eq.s32.totalorder %s31, 1
      %p91 = scmp.ne.s32.totalorder %s86, %s88
      %p92 = scmp.eq.s32.totalorder %s31, 0
      %p93 = por %p91, %p92
      %p94 = scmp.ne.s32.totalorder %s86, %s88
      %p95 = scmp.eq.s32.totalorder %s36, 1
      %p96 = por %p94, %p95
      %p97 = scmp.ne.s32.totalorder %s88, %s89
      %p98 = scmp.eq.s32.totalorder %s36, 0
      %p99 = por %p97, %p98
      %p100 = scmp.ne.s32.totalorder %s88, %s89
      %p101 = scmp.eq.s32.totalorder %s37, 1
      %p102 = por %p100, %p101
      %p104 = scmp.ne.s32.totalorder %s89, %s103
      %p105 = scmp.eq.s32.totalorder %s37, 0
      %p106 = por %p104, %p105
      %s108 = sadd.s32 %s107, 1
      %p111 = scmp.eq.s32.totalorder %s31, 1
      %p112 = scmp.ne.s32.totalorder %s107, %s109
      %p113 = scmp.eq.s32.totalorder %s31, 0
      %p114 = por %p112, %p113
      %p115 = scmp.ne.s32.totalorder %s107, %s109
      %p116 = scmp.eq.s32.totalorder %s36, 1
      %p117 = por %p115, %p116
      %p118 = scmp.ne.s32.totalorder %s109, %s110
      %p119 = scmp.eq.s32.totalorder %s36, 0
      %p120 = por %p118, %p119
      %p121 = scmp.ne.s32.totalorder %s109, %s110
      %p122 = scmp.eq.s32.totalorder %s37, 1
      %p123 = por %p121, %p122
      %p125 = scmp.ne.s32.totalorder %s110, %s124
      %p126 = scmp.eq.s32.totalorder %s37, 0
      %p127 = por %p125, %p126
      %s129 = sadd.s32 %s128, 1
      %p132 = scmp.eq.s32.totalorder %s31, 1
      %p133 = scmp.ne.s32.totalorder %s128, %s130
      %p134 = scmp.eq.s32.totalorder %s31, 0
      %p135 = por %p133, %p134
      %p136 = scmp.ne.s32.totalorder %s128, %s130
      %p137 = scmp.eq.s32.totalorder %s36, 1
      %p138 = por %p136, %p137
      %p139 = scmp.ne.s32.totalorder %s130, %s131
      %p140 = scmp.eq.s32.totalorder %s36, 0
      %p141 = por %p139, %p140
      %p142 = scmp.ne.s32.totalorder %s130, %s131
      %p143 = scmp.eq.s32.totalorder %s37, 1
      %p144 = por %p142, %p143
      %p146 = scmp.ne.s32.totalorder %s131, %s145
      %p147 = scmp.eq.s32.totalorder %s37, 0
      %p148 = por %p146, %p147
      %s150 = sadd.s32 %s149, 1
      %p153 = scmp.eq.s32.totalorder %s31, 1
      %p154 = scmp.ne.s32.totalorder %s149, %s151
      %p155 = scmp.eq.s32.totalorder %s31, 0
      %p156 = por %p154, %p155
      %p157 = scmp.ne.s32.totalorder %s149, %s151
      %p158 = scmp.eq.s32.totalorder %s36, 1
      %p159 = por %p157, %p158
      %p160 = scmp.ne.s32.totalorder %s151, %s152
      %p161 = scmp.eq.s32.totalorder %s36, 0
      %p162 = por %p160, %p161
      %p163 = scmp.ne.s32.totalorder %s151, %s152
      %p164 = scmp.eq.s32.totalorder %s37, 1
      %p165 = por %p163, %p164
      %p167 = scmp.ne.s32.totalorder %s152, %s166
      %p168 = scmp.eq.s32.totalorder %s37, 0
      %p169 = por %p167, %p168
      %s171 = sadd.s32 %s170, 1
      %p174 = scmp.eq.s32.totalorder %s31, 1
      %p175 = scmp.ne.s32.totalorder %s170, %s172
      %p176 = scmp.eq.s32.totalorder %s31, 0
      %p177 = por %p175, %p176
      %p178 = scmp.ne.s32.totalorder %s170, %s172
      %p179 = scmp.eq.s32.totalorder %s36, 1
      %p180 = por %p178, %p179
      %p181 = scmp.ne.s32.totalorder %s172, %s173
      %p182 = scmp.eq.s32.totalorder %s36, 0
      %p183 = por %p181, %p182
      %p184 = scmp.ne.s32.totalorder %s172, %s173
      %p185 = scmp.eq.s32.totalorder %s37, 1
      %p186 = por %p184, %p185
      %p188 = scmp.ne.s32.totalorder %s173, %s187
      %p189 = scmp.eq.s32.totalorder %s37, 0
      %p190 = por %p188, %p189
      %s192 = sadd.s32 %s191, 1
      %p195 = scmp.eq.s32.totalorder %s31, 1
      %p196 = scmp.ne.s32.totalorder %s191, %s193
      %p197 = scmp.eq.s32.totalorder %s31, 0
      %p198 = por %p196, %p197
      %p199 = scmp.ne.s32.totalorder %s191, %s193
      %p200 = scmp.eq.s32.totalorder %s36, 1
      %p201 = por %p199, %p200
      %p202 = scmp.ne.s32.totalorder %s193, %s194
      %p203 = scmp.eq.s32.totalorder %s36, 0
      %p204 = por %p202, %p203
      %p205 = scmp.ne.s32.totalorder %s193, %s194
      %p206 = scmp.eq.s32.totalorder %s37, 1
      %p207 = por %p205, %p206
      %p209 = scmp.ne.s32.totalorder %s194, %s208
      %p210 = scmp.eq.s32.totalorder %s37, 0
      %p211 = por %p209, %p210
      %s213 = sadd.s32 %s212, 1
      %p216 = scmp.eq.s32.totalorder %s31, 1
      %p217 = scmp.ne.s32.totalorder %s212, %s214
      %p218 = scmp.eq.s32.totalorder %s31, 0
      %p219 = por %p217, %p218
      %p220 = scmp.ne.s32.totalorder %s212, %s214
      %p221 = scmp.eq.s32.totalorder %s36, 1
      %p222 = por %p220, %p221
      %p223 = scmp.ne.s32.totalorder %s214, %s215
      %p224 = scmp.eq.s32.totalorder %s36, 0
      %p225 = por %p223, %p224
      %p226 = scmp.ne.s32.totalorder %s214, %s215
      %p227 = scmp.eq.s32.totalorder %s37, 1
      %p228 = por %p226, %p227
      %p230 = scmp.ne.s32.totalorder %s215, %s229
      %p231 = scmp.eq.s32.totalorder %s37, 0
      %p232 = por %p230, %p231
      %s234 = sadd.s32 %s233, 1
      %p237 = scmp.eq.s32.totalorder %s31, 1
      %p238 = scmp.ne.s32.totalorder %s233, %s235
      %p239 = scmp.eq.s32.totalorder %s31, 0
      %p240 = por %p238, %p239
      %p241 = scmp.ne.s32.totalorder %s233, %s235
      %p242 = scmp.eq.s32.totalorder %s36, 1
      %p243 = por %p241, %p242
      %p244 = scmp.ne.s32.totalorder %s235, %s236
      %p245 = scmp.eq.s32.totalorder %s36, 0
      %p246 = por %p244, %p245
      %p247 = scmp.ne.s32.totalorder %s235, %s236
      %p248 = scmp.eq.s32.totalorder %s37, 1
      %p249 = por %p247, %p248
      %p251 = scmp.ne.s32.totalorder %s236, %s250
      %p252 = scmp.eq.s32.totalorder %s37, 0
      %p253 = por %p251, %p252
      %s255 = sadd.s32 %s254, 1
      %p258 = scmp.eq.s32.totalorder %s31, 1
      %p259 = scmp.ne.s32.totalorder %s254, %s256
      %p260 = scmp.eq.s32.totalorder %s31, 0
      %p261 = por %p259, %p260
      %p262 = scmp.ne.s32.totalorder %s254, %s256
      %p263 = scmp.eq.s32.totalorder %s36, 1
      %p264 = por %p262, %p263
      %p265 = scmp.ne.s32.totalorder %s256, %s257
      %p266 = scmp.eq.s32.totalorder %s36, 0
      %p267 = por %p265, %p266
      %p268 = scmp.ne.s32.totalorder %s256, %s257
      %p269 = scmp.eq.s32.totalorder %s37, 1
      %p270 = por %p268, %p269
      %p272 = scmp.ne.s32.totalorder %s257, %s271
      %p273 = scmp.eq.s32.totalorder %s37, 0
      %p274 = por %p272, %p273
      %s276 = sadd.s32 %s275, 1
      %p279 = scmp.eq.s32.totalorder %s31, 1
      %p280 = scmp.ne.s32.totalorder %s275, %s277
      %p281 = scmp.eq.s32.totalorder %s31, 0
      %p282 = por %p280, %p281
      %p283 = scmp.ne.s32.totalorder %s275, %s277
      %p284 = scmp.eq.s32.totalorder %s36, 1
      %p285 = por %p283, %p284
      %p286 = scmp.ne.s32.totalorder %s277, %s278
      %p287 = scmp.eq.s32.totalorder %s36, 0
      %p288 = por %p286, %p287
      %p289 = scmp.ne.s32.totalorder %s277, %s278
      %p290 = scmp.eq.s32.totalorder %s37, 1
      %p291 = por %p289, %p290
      %p293 = scmp.ne.s32.totalorder %s278, %s292
      %p294 = scmp.eq.s32.totalorder %s37, 0
      %p295 = por %p293, %p294
      %s297 = sadd.s32 %s296, 1
      %p300 = scmp.eq.s32.totalorder %s31, 1
      %p301 = scmp.ne.s32.totalorder %s296, %s298
      %p302 = scmp.eq.s32.totalorder %s31, 0
      %p303 = por %p301, %p302
      %p304 = scmp.ne.s32.totalorder %s296, %s298
      %p305 = scmp.eq.s32.totalorder %s36, 1
      %p306 = por %p304, %p305
      %p307 = scmp.ne.s32.totalorder %s298, %s299
      %p308 = scmp.eq.s32.totalorder %s36, 0
      %p309 = por %p307, %p308
      %p310 = scmp.ne.s32.totalorder %s298, %s299
      %p311 = scmp.eq.s32.totalorder %s37, 1
      %p312 = por %p310, %p311
      %p314 = scmp.ne.s32.totalorder %s299, %s313
      %p315 = scmp.eq.s32.totalorder %s37, 0
      %p316 = por %p314, %p315
      %s317 = ssub.s32 %s31, %s38
      %p318 = scmp.eq.s32.totalorder %s317, 0
      %s320 = sadd.s32 %s319, 1
      %s321 = scalar_select %p318, %s319, %s320
      %p324 = pneg %p318
      %p325 = scmp.eq.s32.totalorder %s31, 1
      %p326 = por %p324, %p325
      %p327 = scmp.ne.s32.totalorder %s319, %s322
      %p328 = scmp.eq.s32.totalorder %s31, 0
      %p329 = por %p327, %p328
      %p330 = scmp.ne.s32.totalorder %s319, %s322
      %p331 = scmp.eq.s32.totalorder %s36, 1
      %p332 = por %p330, %p331
      %p333 = scmp.ne.s32.totalorder %s322, %s323
      %p334 = scmp.eq.s32.totalorder %s36, 0
      %p335 = por %p333, %p334
      %p336 = scmp.ne.s32.totalorder %s322, %s323
      %p337 = scmp.eq.s32.totalorder %s37, 1
      %p338 = por %p336, %p337
      %p340 = scmp.ne.s32.totalorder %s323, %s339
      %p341 = scmp.eq.s32.totalorder %s37, 0
      %p342 = por %p340, %p341
      %p343 = scmp.le.s32.totalorder 1, %s31
      %p344 = scmp.lt.s32.totalorder %s31, 3
      %p345 = pnand %p343, %p344
      %p346 = pneg %p345
      // Predicated region
      $region9: #{tpu_custom_call.1} parent=5 // pred_check
        _
      $region10: #{tpu_custom_call.1} parent=5 // pred_check_branch
        %348 = sbr.rel (%p345) target = $region12
      $region11: #{tpu_custom_call.1} parent=5 // pred_region
        %s349 = ssub.s32 %s31, 1
        // Predicated region
        $region13: #{tpu_custom_call.1} parent=11 // pred_check
          %p350 = pneg %p78
        $region14: #{tpu_custom_call.1} parent=11 // pred_check_branch
          %352 = sbr.rel (%p350) target = $region16
        $region15: #{tpu_custom_call.1} parent=11 // pred_region
          %s354 = ssub.s32 512, 512
          %355 = vsyncadd [#allocation6], %s354
          %s356 = sshll.u32 [#allocation5], 4
          %s357 = int_to_ptr.vmem [resolvable:$true] %s356
          %362 = dma.hbm_to_vmem [thread:$0]  %s1, 512, %s357, [#allocation6], 128, 128, 8
        $region16: #{tpu_custom_call.1} parent=11 // pred_fallthru
          _
        // Predicated region
        $region17: #{tpu_custom_call.1} parent=11 // pred_check
          %p363 = pneg %p99
        $region18: #{tpu_custom_call.1} parent=11 // pred_check_branch
          %365 = sbr.rel (%p363) target = $region20
        $region19: #{tpu_custom_call.1} parent=11 // pred_region
          %s367 = ssub.s32 16, 16
          %368 = vsyncadd [#allocation6], %s367
          %s370 = sshll.u32 [#allocation7], 4
          %s371 = int_to_ptr.vmem [resolvable:$true] %s370
          %373 = dma.hbm_to_vmem [thread:$0]  %s2, 16, %s371, [#allocation6]
        $region20: #{tpu_custom_call.1} parent=11 // pred_fallthru
          _
        // Predicated region
        $region21: #{tpu_custom_call.1} parent=11 // pred_check
          %p374 = pneg %p120
        $region22: #{tpu_custom_call.1} parent=11 // pred_check_branch
          %376 = sbr.rel (%p374) target = $region24
        $region23: #{tpu_custom_call.1} parent=11 // pred_region
          %s378 = ssub.s32 512, 512
          %379 = vsyncadd [#allocation9], %s378
          %s380 = sshll.u32 [#allocation8], 4
          %s381 = int_to_ptr.vmem [resolvable:$true] %s380
          %386 = dma.hbm_to_vmem [thread:$0]  %s3, 512, %s381, [#allocation9], 128, 128, 8
        $region24: #{tpu_custom_call.1} parent=11 // pred_fallthru
          _
        // Predicated region
        $region25: #{tpu_custom_call.1} parent=11 // pred_check
          %p387 = pneg %p141
        $region26: #{tpu_custom_call.1} parent=11 // pred_check_branch
          %389 = sbr.rel (%p387) target = $region28
        $region27: #{tpu_custom_call.1} parent=11 // pred_region
          %s391 = ssub.s32 16, 16
          %392 = vsyncadd [#allocation9], %s391
          %s394 = sshll.u32 [#allocation10], 4
          %s395 = int_to_ptr.vmem [resolvable:$true] %s394
          %397 = dma.hbm_to_vmem [thread:$0]  %s4, 16, %s395, [#allocation9]
        $region28: #{tpu_custom_call.1} parent=11 // pred_fallthru
          _
        // Predicated region
        $region29: #{tpu_custom_call.1} parent=11 // pred_check
          %p398 = pneg %p162
        $region30: #{tpu_custom_call.1} parent=11 // pred_check_branch
          %400 = sbr.rel (%p398) target = $region32
        $region31: #{tpu_custom_call.1} parent=11 // pred_region
          %s402 = ssub.s32 16, 16
          %403 = vsyncadd [#allocation12], %s402
          %s405 = sshll.u32 [#allocation11], 4
          %s406 = int_to_ptr.vmem [resolvable:$true] %s405
          %408 = dma.hbm_to_vmem [thread:$0]  %s5, 16, %s406, [#allocation12]
        $region32: #{tpu_custom_call.1} parent=11 // pred_fallthru
          _
        // Predicated region
        $region33: #{tpu_custom_call.1} parent=11 // pred_check
          %p409 = pneg %p183
        $region34: #{tpu_custom_call.1} parent=11 // pred_check_branch
          %411 = sbr.rel (%p409) target = $region36
        $region35: #{tpu_custom_call.1} parent=11 // pred_region
          %s413 = ssub.s32 16, 16
          %414 = vsyncadd [#allocation12], %s413
          %s416 = sshll.u32 [#allocation13], 4
          %s417 = int_to_ptr.vmem [resolvable:$true] %s416
          %419 = dma.hbm_to_vmem [thread:$0]  %s6, 16, %s417, [#allocation12]
        $region36: #{tpu_custom_call.1} parent=11 // pred_fallthru
          _
        // Predicated region
        $region37: #{tpu_custom_call.1} parent=11 // pred_check
          %p420 = pneg %p204
        $region38: #{tpu_custom_call.1} parent=11 // pred_check_branch
          %422 = sbr.rel (%p420) target = $region40
        $region39: #{tpu_custom_call.1} parent=11 // pred_region
          %s424 = ssub.s32 512, 512
          %425 = vsyncadd [#allocation15], %s424
          %s426 = sshll.u32 [#allocation14], 4
          %s427 = int_to_ptr.vmem [resolvable:$true] %s426
          %432 = dma.hbm_to_vmem [thread:$0]  %s7, 512, %s427, [#allocation15], 128, 128, 8
        $region40: #{tpu_custom_call.1} parent=11 // pred_fallthru
          _
        // Predicated region
        $region41: #{tpu_custom_call.1} parent=11 // pred_check
          %p433 = pneg %p225
        $region42: #{tpu_custom_call.1} parent=11 // pred_check_branch
          %435 = sbr.rel (%p433) target = $region44
        $region43: #{tpu_custom_call.1} parent=11 // pred_region
          %s437 = ssub.s32 16, 16
          %438 = vsyncadd [#allocation15], %s437
          %s440 = sshll.u32 [#allocation16], 4
          %s441 = int_to_ptr.vmem [resolvable:$true] %s440
          %443 = dma.hbm_to_vmem [thread:$0]  %s8, 16, %s441, [#allocation15]
        $region44: #{tpu_custom_call.1} parent=11 // pred_fallthru
          _
        // Predicated region
        $region45: #{tpu_custom_call.1} parent=11 // pred_check
          %p444 = pneg %p246
        $region46: #{tpu_custom_call.1} parent=11 // pred_check_branch
          %446 = sbr.rel (%p444) target = $region48
        $region47: #{tpu_custom_call.1} parent=11 // pred_region
          %s448 = ssub.s32 1024, 1024
          %449 = vsyncadd [#allocation18], %s448
          %s450 = sshll.u32 [#allocation17], 4
          %s451 = int_to_ptr.vmem [resolvable:$true] %s450
          %456 = dma.hbm_to_vmem [thread:$0]  %s9, 1024, %s451, [#allocation18], 128, 128, 8
        $region48: #{tpu_custom_call.1} parent=11 // pred_fallthru
          _
        // Predicated region
        $region49: #{tpu_custom_call.1} parent=11 // pred_check
          %p457 = pneg %p267
        $region50: #{tpu_custom_call.1} parent=11 // pred_check_branch
          %459 = sbr.rel (%p457) target = $region52
        $region51: #{tpu_custom_call.1} parent=11 // pred_region
          %s461 = ssub.s32 16, 16
          %462 = vsyncadd [#allocation18], %s461
          %s464 = sshll.u32 [#allocation19], 4
          %s465 = int_to_ptr.vmem [resolvable:$true] %s464
          %467 = dma.hbm_to_vmem [thread:$0]  %s10, 16, %s465, [#allocation18]
        $region52: #{tpu_custom_call.1} parent=11 // pred_fallthru
          _
        // Predicated region
        $region53: #{tpu_custom_call.1} parent=11 // pred_check
          %p468 = pneg %p288
        $region54: #{tpu_custom_call.1} parent=11 // pred_check_branch
          %470 = sbr.rel (%p468) target = $region56
        $region55: #{tpu_custom_call.1} parent=11 // pred_region
          %s472 = ssub.s32 16, 16
          %473 = vsyncadd [#allocation21], %s472
          %s475 = sshll.u32 [#allocation20], 4
          %s476 = int_to_ptr.vmem [resolvable:$true] %s475
          %478 = dma.hbm_to_vmem [thread:$0]  %s11, 16, %s476, [#allocation21]
        $region56: #{tpu_custom_call.1} parent=11 // pred_fallthru
          _
        // Predicated region
        $region57: #{tpu_custom_call.1} parent=11 // pred_check
          %p479 = pneg %p309
        $region58: #{tpu_custom_call.1} parent=11 // pred_check_branch
          %481 = sbr.rel (%p479) target = $region60
        $region59: #{tpu_custom_call.1} parent=11 // pred_region
          %s483 = ssub.s32 16, 16
          %484 = vsyncadd [#allocation21], %s483
          %s486 = sshll.u32 [#allocation22], 4
          %s487 = int_to_ptr.vmem [resolvable:$true] %s486
          %489 = dma.hbm_to_vmem [thread:$0]  %s12, 16, %s487, [#allocation21]
        $region60: #{tpu_custom_call.1} parent=11 // pred_fallthru
          _
      $region12: #{tpu_custom_call.1} parent=5 // pred_fallthru
        _
      %p490 = scmp.lt.s32.totalorder %s31, 2
      // Predicated region
      $region61: #{tpu_custom_call.1} parent=5 // pred_check
        %p491 = pneg %p490
      $region62: #{tpu_custom_call.1} parent=5 // pred_check_branch
        %493 = sbr.rel (%p491) target = $region64
      $region63: #{tpu_custom_call.1} parent=5 // pred_region
        // Predicated region
        $region65: #{tpu_custom_call.1} parent=63 // pred_check
          %p494 = pneg %p51
        $region66: #{tpu_custom_call.1} parent=63 // pred_check_branch
          %496 = sbr.rel (%p494) target = $region68
        $region67: #{tpu_custom_call.1} parent=63 // pred_region
          %s497 = sand.u32 %s41, 1
          %s498 = scalar_lea.sflag [#allocation3], %s497
          %s499 = sand.u32 %s41, 1
          %s500 = smul.addr %s499, 8
          %s501 = scalar_lea.vmem [#allocation2], %s500
          %s503 = ssub.s32 128, 128
          %504 = vsyncadd %s498, %s503
          %s505 = smul.addr %s31, 128
          %s506 = scalar_lea.hbm %s0, %s505
          %s508 = sshll.u32 %s501, 4
          %s509 = int_to_ptr.vmem [resolvable:$true] %s508
          %511 = dma.hbm_to_vmem [thread:$0]  %s506, 128, %s509, %s498
        $region68: #{tpu_custom_call.1} parent=63 // pred_fallthru
          _
      $region64: #{tpu_custom_call.1} parent=5 // pred_fallthru
        _
      %p512 = scmp.le.s32.totalorder 1, %s31
      %p513 = scmp.lt.s32.totalorder %s31, 3
      %p514 = pnand %p512, %p513
      %p515 = pneg %p514
      // Predicated region
      $region69: #{tpu_custom_call.1} parent=5 // pred_check
        _
      $region70: #{tpu_custom_call.1} parent=5 // pred_check_branch
        %517 = sbr.rel (%p514) target = $region72
      $region71: #{tpu_custom_call.1} parent=5 // pred_region
        %s518 = ssub.s32 %s31, 1
        %s519 = sand.u32 %s44, 1
        %s520 = scalar_lea.sflag [#allocation3], %s519
        %s521 = sand.u32 %s44, 1
        %s522 = smul.addr %s521, 8
        %s523 = scalar_lea.vmem [#allocation2], %s522
        // Predicated region
        $region73: #{tpu_custom_call.1} parent=71 // pred_check
          %p524 = pneg %p57
        $region74: #{tpu_custom_call.1} parent=71 // pred_check_branch
          %526 = sbr.rel (%p524) target = $region76
        $region75: #{tpu_custom_call.1} parent=71 // pred_region
          %527 = dma.done %s520, 128
        $region76: #{tpu_custom_call.1} parent=71 // pred_fallthru
          _
        // Predicated region
        $region77: #{tpu_custom_call.1} parent=71 // pred_check
          %p528 = pneg %p78
        $region78: #{tpu_custom_call.1} parent=71 // pred_check_branch
          %530 = sbr.rel (%p528) target = $region80
        $region79: #{tpu_custom_call.1} parent=71 // pred_region
          %531 = dma.done [#allocation6], 512
        $region80: #{tpu_custom_call.1} parent=71 // pred_fallthru
          _
        // Predicated region
        $region81: #{tpu_custom_call.1} parent=71 // pred_check
          %p532 = pneg %p99
        $region82: #{tpu_custom_call.1} parent=71 // pred_check_branch
          %534 = sbr.rel (%p532) target = $region84
        $region83: #{tpu_custom_call.1} parent=71 // pred_region
          %535 = dma.done [#allocation6], 16
        $region84: #{tpu_custom_call.1} parent=71 // pred_fallthru
          _
        // Predicated region
        $region85: #{tpu_custom_call.1} parent=71 // pred_check
          %p536 = pneg %p120
        $region86: #{tpu_custom_call.1} parent=71 // pred_check_branch
          %538 = sbr.rel (%p536) target = $region88
        $region87: #{tpu_custom_call.1} parent=71 // pred_region
          %539 = dma.done [#allocation9], 512
        $region88: #{tpu_custom_call.1} parent=71 // pred_fallthru
          _
        // Predicated region
        $region89: #{tpu_custom_call.1} parent=71 // pred_check
          %p540 = pneg %p141
        $region90: #{tpu_custom_call.1} parent=71 // pred_check_branch
          %542 = sbr.rel (%p540) target = $region92
        $region91: #{tpu_custom_call.1} parent=71 // pred_region
          %543 = dma.done [#allocation9], 16
        $region92: #{tpu_custom_call.1} parent=71 // pred_fallthru
          _
        // Predicated region
        $region93: #{tpu_custom_call.1} parent=71 // pred_check
          %p544 = pneg %p162
        $region94: #{tpu_custom_call.1} parent=71 // pred_check_branch
          %546 = sbr.rel (%p544) target = $region96
        $region95: #{tpu_custom_call.1} parent=71 // pred_region
          %547 = dma.done [#allocation12], 16
        $region96: #{tpu_custom_call.1} parent=71 // pred_fallthru
          _
        // Predicated region
        $region97: #{tpu_custom_call.1} parent=71 // pred_check
          %p548 = pneg %p183
        $region98: #{tpu_custom_call.1} parent=71 // pred_check_branch
          %550 = sbr.rel (%p548) target = $region100
        $region99: #{tpu_custom_call.1} parent=71 // pred_region
          %551 = dma.done [#allocation12], 16
        $region100: #{tpu_custom_call.1} parent=71 // pred_fallthru
          _
        // Predicated region
        $region101: #{tpu_custom_call.1} parent=71 // pred_check
          %p552 = pneg %p204
        $region102: #{tpu_custom_call.1} parent=71 // pred_check_branch
          %554 = sbr.rel (%p552) target = $region104
        $region103: #{tpu_custom_call.1} parent=71 // pred_region
          %555 = dma.done [#allocation15], 512
        $region104: #{tpu_custom_call.1} parent=71 // pred_fallthru
          _
        // Predicated region
        $region105: #{tpu_custom_call.1} parent=71 // pred_check
          %p556 = pneg %p225
        $region106: #{tpu_custom_call.1} parent=71 // pred_check_branch
          %558 = sbr.rel (%p556) target = $region108
        $region107: #{tpu_custom_call.1} parent=71 // pred_region
          %559 = dma.done [#allocation15], 16
        $region108: #{tpu_custom_call.1} parent=71 // pred_fallthru
          _
        // Predicated region
        $region109: #{tpu_custom_call.1} parent=71 // pred_check
          %p560 = pneg %p246
        $region110: #{tpu_custom_call.1} parent=71 // pred_check_branch
          %562 = sbr.rel (%p560) target = $region112
        $region111: #{tpu_custom_call.1} parent=71 // pred_region
          %563 = dma.done [#allocation18], 1024
        $region112: #{tpu_custom_call.1} parent=71 // pred_fallthru
          _
        // Predicated region
        $region113: #{tpu_custom_call.1} parent=71 // pred_check
          %p564 = pneg %p267
        $region114: #{tpu_custom_call.1} parent=71 // pred_check_branch
          %566 = sbr.rel (%p564) target = $region116
        $region115: #{tpu_custom_call.1} parent=71 // pred_region
          %567 = dma.done [#allocation18], 16
        $region116: #{tpu_custom_call.1} parent=71 // pred_fallthru
          _
        // Predicated region
        $region117: #{tpu_custom_call.1} parent=71 // pred_check
          %p568 = pneg %p288
        $region118: #{tpu_custom_call.1} parent=71 // pred_check_branch
          %570 = sbr.rel (%p568) target = $region120
        $region119: #{tpu_custom_call.1} parent=71 // pred_region
          %571 = dma.done [#allocation21], 16
        $region120: #{tpu_custom_call.1} parent=71 // pred_fallthru
          _
        // Predicated region
        $region121: #{tpu_custom_call.1} parent=71 // pred_check
          %p572 = pneg %p309
        $region122: #{tpu_custom_call.1} parent=71 // pred_check_branch
          %574 = sbr.rel (%p572) target = $region124
        $region123: #{tpu_custom_call.1} parent=71 // pred_region
          %575 = dma.done [#allocation21], 16
        $region124: #{tpu_custom_call.1} parent=71 // pred_fallthru
          _
        %s576 = sand.u32 %s44, 1
        %s577 = scalar_lea.sflag [#allocation3], %s576
        %s578 = sand.u32 %s44, 1
        %s579 = smul.addr %s578, 8
        %s580 = scalar_lea.vmem [#allocation2], %s579
        %p581 = pneg %p57
        %p582 = pneg %p54
        %p583 = pneg %p78
        %p584 = pneg %p75
        %p585 = pneg %p99
        %p586 = pneg %p96
        %p587 = pneg %p120
        %p588 = pneg %p117
        %p589 = pneg %p141
        %p590 = pneg %p138
        %p591 = pneg %p162
        %p592 = pneg %p159
        %p593 = pneg %p183
        %p594 = pneg %p180
        %p595 = pneg %p204
        %p596 = pneg %p201
        %p597 = pneg %p225
        %p598 = pneg %p222
        %p599 = pneg %p246
        %p600 = pneg %p243
        %p601 = pneg %p267
        %p602 = pneg %p264
        %p603 = pneg %p288
        %p604 = pneg %p285
        %p605 = pneg %p309
        %p606 = pneg %p306
        %p607 = pneg %p335
        %p608 = pneg %p332
        %s609 = sand.u32 %s322, 1
        %s610 = scalar_lea.sflag [#allocation4], %s609
        %s611 = sand.u32 %s322, 1
        %s612 = smul.addr %s611, 8
        %s613 = scalar_lea.vmem [#allocation23], %s612
        %v614 = vld [vmem:[%s523] sm:$0xff]
        %v615 = vld [vmem:[#allocation5] sm:$0xff]
        %v616 = vld [vmem:[#allocation5 + $0x8] sm:$0xff]
        %v617 = vld [vmem:[#allocation5 + $0x10] sm:$0xff]
        %v618 = vld [vmem:[#allocation5 + $0x18] sm:$0xff]
        %v619 = vld [vmem:[#allocation7] sm:$0x1]
        %v621 = vlaneseq
        %v622 = vshrl.u32 %v621, 7
        %v623 = vsub.s32 0, %v622
        %v624 = vrot.slane %v619, %v623
        %vm626 = vcmask 261120
        %v628 = vsel %vm626, %v614, 0
        %630 = vmatprep.subr.mxu0 0.0
        %631 = vmatpush1.msra.mxu0 %v615
        %632 = vmatprep.subr.mxu0 0.0
        %633 = vmatpush1.msra.mxu0 %v616
        %634 = vmatprep.subr.mxu0 0.0
        %635 = vmatpush1.msra.mxu0 %v617
        %636 = vmatprep.subr.mxu0 0.0
        %637 = vmatpush1.msra.mxu0 %v618
        %638 = vmatprep.subr.mxu0 0.0
        %639 = vmatpush1.msra.mxu0 0.0
        %640 = vmatprep.subr.mxu0 0.0
        %641 = vmatpush1.msra.mxu0 0.0
        %642 = vmatprep.subr.mxu0 0.0
        %643 = vmatpush1.msra.mxu0 0.0
        %644 = vmatprep.subr.mxu0 0.0
        %645 = vmatpush1.msra.mxu0 0.0
        %646 = vmatprep.subr.mxu0 0.0
        %647 = vmatpush1.msra.mxu0 0.0
        %648 = vmatprep.subr.mxu0 0.0
        %649 = vmatpush1.msra.mxu0 0.0
        %650 = vmatprep.subr.mxu0 0.0
        %651 = vmatpush1.msra.mxu0 0.0
        %652 = vmatprep.subr.mxu0 0.0
        %653 = vmatpush1.msra.mxu0 0.0
        %654 = vmatprep.subr.mxu0 0.0
        %655 = vmatpush1.msra.mxu0 0.0
        %656 = vmatprep.subr.mxu0 0.0
        %657 = vmatpush1.msra.mxu0 0.0
        %658 = vmatprep.subr.mxu0 0.0
        %659 = vmatpush1.msra.mxu0 0.0
        %660 = vmatprep.subr.mxu0 0.0
        %661 = vmatpush1.msra.mxu0 0.0
        %662 = vmatprep.subr.mxu0 0.0
        %663 = vmatpush1.msra.mxu0 0.0
        %664 = vmatprep.subr.mxu0 0.0
        %665 = vmatpush1.msra.mxu0 0.0
        %666 = vmatprep.subr.mxu0 0.0
        %667 = vmatpush1.msra.mxu0 0.0
        %668 = vmatprep.subr.mxu0 0.0
        %669 = vmatpush1.msra.mxu0 0.0
        %670 = vmatprep.subr.mxu0 0.0
        %671 = vmatpush1.msra.mxu0 0.0
        %672 = vmatprep.subr.mxu0 0.0
        %673 = vmatpush1.msra.mxu0 0.0
        %674 = vmatprep.subr.mxu0 0.0
        %675 = vmatpush1.msra.mxu0 0.0
        %676 = vmatprep.subr.mxu0 0.0
        %677 = vmatpush1.msra.mxu0 0.0
        %678 = vmatprep.subr.mxu0 0.0
        %679 = vmatpush1.msra.mxu0 0.0
        %680 = vmatprep.subr.mxu0 0.0
        %681 = vmatpush1.msra.mxu0 0.0
        %682 = vmatprep.subr.mxu0 0.0
        %683 = vmatpush1.msra.mxu0 0.0
        %684 = vmatprep.subr.mxu0 0.0
        %685 = vmatpush1.msra.mxu0 0.0
        %686 = vmatprep.subr.mxu0 0.0
        %687 = vmatpush1.msra.mxu0 0.0
        %688 = vmatprep.subr.mxu0 0.0
        %689 = vmatpush1.msra.mxu0 0.0
        %690 = vmatprep.subr.mxu0 0.0
        %691 = vmatpush1.msra.mxu0 0.0
        %692 = vmatprep.subr.mxu0 0.0
        %693 = vmatpush1.msra.mxu0 0.0
        %694 = vmatprep.mubr.f32.mxu0 0.0
        %695 = vmatmul.mubr.f32.gmra.mrb[0].mxu0 %v628
        %v696 = vpop.f32.mrb[0].mxu0
        %v697 = vadd.f32 %v624, %v696
        %v698 = vpop.f32.mrb[0].mxu0
        %699 = vdwg.mxu0
        %701 = vrot.lane.b32.xlu0 %v697, 120
        %v702 = vpop.permute.xlu0 %701
        %704 = vrot.lane.b32.xlu0 %v697, 112
        %v705 = vpop.permute.xlu0 %704
        %707 = vrot.lane.b32.xlu0 %v697, 104
        %v708 = vpop.permute.xlu0 %707
        %v710 = vmul.f32 %v697, 0.35355338
        %v711 = vmul.f32 %v702, 0.35355338
        %v712 = vmul.f32 %v705, 0.35355338
        %v713 = vmul.f32 %v708, 0.35355338
        %714 = vrot.lane.b32.xlu0 %v697, 96
        %v715 = vpop.permute.xlu0 %714
        %vm716 = vcmask 64512
        %v718 = vsel %vm716, %v710, 0
        %v720 = vsel %vm716, %v715, 0
        %722 = vmatprep.subr.mxu0 0.0
        %723 = vmatpush1.xpose.msra.mxu0 %v720
        %724 = vmatprep.subr.mxu0 0.0
        %725 = vmatpush1.xpose.msra.mxu0 0.0
        %726 = vmatprep.subr.mxu0 0.0
        %727 = vmatpush1.xpose.msra.mxu0 0.0
        %728 = vmatprep.subr.mxu0 0.0
        %729 = vmatpush1.xpose.msra.mxu0 0.0
        %730 = vmatprep.subr.mxu0 0.0
        %731 = vmatpush1.xpose.msra.mxu0 0.0
        %732 = vmatprep.subr.mxu0 0.0
        %733 = vmatpush1.xpose.msra.mxu0 0.0
        %734 = vmatprep.subr.mxu0 0.0
        %735 = vmatpush1.xpose.msra.mxu0 0.0
        %736 = vmatprep.subr.mxu0 0.0
        %737 = vmatpush1.xpose.msra.mxu0 0.0
        %738 = vmatprep.subr.mxu0 0.0
        %739 = vmatpush1.xpose.msra.mxu0 0.0
        %740 = vmatprep.subr.mxu0 0.0
        %741 = vmatpush1.xpose.msra.mxu0 0.0
        %742 = vmatprep.subr.mxu0 0.0
        %743 = vmatpush1.xpose.msra.mxu0 0.0
        %744 = vmatprep.subr.mxu0 0.0
        %745 = vmatpush1.xpose.msra.mxu0 0.0
        %746 = vmatprep.subr.mxu0 0.0
        %747 = vmatpush1.xpose.msra.mxu0 0.0
        %748 = vmatprep.subr.mxu0 0.0
        %749 = vmatpush1.xpose.msra.mxu0 0.0
        %750 = vmatprep.subr.mxu0 0.0
        %751 = vmatpush1.xpose.msra.mxu0 0.0
        %752 = vmatprep.subr.mxu0 0.0
        %753 = vmatpush1.xpose.msra.mxu0 0.0
        %754 = vmatprep.subr.mxu0 0.0
        %755 = vmatpush1.xpose.msra.mxu0 0.0
        %756 = vmatprep.subr.mxu0 0.0
        %757 = vmatpush1.xpose.msra.mxu0 0.0
        %758 = vmatprep.subr.mxu0 0.0
        %759 = vmatpush1.xpose.msra.mxu0 0.0
        %760 = vmatprep.subr.mxu0 0.0
        %761 = vmatpush1.xpose.msra.mxu0 0.0
        %762 = vmatprep.subr.mxu0 0.0
        %763 = vmatpush1.xpose.msra.mxu0 0.0
        %764 = vmatprep.subr.mxu0 0.0
        %765 = vmatpush1.xpose.msra.mxu0 0.0
        %766 = vmatprep.subr.mxu0 0.0
        %767 = vmatpush1.xpose.msra.mxu0 0.0
        %768 = vmatprep.subr.mxu0 0.0
        %769 = vmatpush1.xpose.msra.mxu0 0.0
        %770 = vmatprep.subr.mxu0 0.0
        %771 = vmatpush1.xpose.msra.mxu0 0.0
        %772 = vmatprep.subr.mxu0 0.0
        %773 = vmatpush1.xpose.msra.mxu0 0.0
        %774 = vmatprep.subr.mxu0 0.0
        %775 = vmatpush1.xpose.msra.mxu0 0.0
        %776 = vmatprep.subr.mxu0 0.0
        %777 = vmatpush1.xpose.msra.mxu0 0.0
        %778 = vmatprep.subr.mxu0 0.0
        %779 = vmatpush1.xpose.msra.mxu0 0.0
        %780 = vmatprep.subr.mxu0 0.0
        %781 = vmatpush1.xpose.msra.mxu0 0.0
        %782 = vmatprep.subr.mxu0 0.0
        %783 = vmatpush1.xpose.msra.mxu0 0.0
        %784 = vmatprep.subr.mxu0 0.0
        %785 = vmatpush1.xpose.msra.mxu0 0.0
        %786 = vmatprep.mubr.f32.mxu0 0.0
        %787 = vmatmul.mubr.f32.gmra.mrb[0].mxu0 %v718
        %v788 = vpop.f32.mrb[0].mxu0
        %v789 = vadd.f32 0.0, %v788
        %v790 = vpop.f32.mrb[0].mxu0
        %791 = vdwg.mxu0
        %792 = vrot.lane.b32.xlu0 %v702, 96
        %v793 = vpop.permute.xlu0 %792
        %v795 = vsel %vm716, %v711, 0
        %v797 = vsel %vm716, %v793, 0
        %799 = vmatprep.subr.mxu0 0.0
        %800 = vmatpush1.xpose.msra.mxu0 %v797
        %801 = vmatprep.subr.mxu0 0.0
        %802 = vmatpush1.xpose.msra.mxu0 0.0
        %803 = vmatprep.subr.mxu0 0.0
        %804 = vmatpush1.xpose.msra.mxu0 0.0
        %805 = vmatprep.subr.mxu0 0.0
        %806 = vmatpush1.xpose.msra.mxu0 0.0
        %807 = vmatprep.subr.mxu0 0.0
        %808 = vmatpush1.xpose.msra.mxu0 0.0
        %809 = vmatprep.subr.mxu0 0.0
        %810 = vmatpush1.xpose.msra.mxu0 0.0
        %811 = vmatprep.subr.mxu0 0.0
        %812 = vmatpush1.xpose.msra.mxu0 0.0
        %813 = vmatprep.subr.mxu0 0.0
        %814 = vmatpush1.xpose.msra.mxu0 0.0
        %815 = vmatprep.subr.mxu0 0.0
        %816 = vmatpush1.xpose.msra.mxu0 0.0
        %817 = vmatprep.subr.mxu0 0.0
        %818 = vmatpush1.xpose.msra.mxu0 0.0
        %819 = vmatprep.subr.mxu0 0.0
        %820 = vmatpush1.xpose.msra.mxu0 0.0
        %821 = vmatprep.subr.mxu0 0.0
        %822 = vmatpush1.xpose.msra.mxu0 0.0
        %823 = vmatprep.subr.mxu0 0.0
        %824 = vmatpush1.xpose.msra.mxu0 0.0
        %825 = vmatprep.subr.mxu0 0.0
        %826 = vmatpush1.xpose.msra.mxu0 0.0
        %827 = vmatprep.subr.mxu0 0.0
        %828 = vmatpush1.xpose.msra.mxu0 0.0
        %829 = vmatprep.subr.mxu0 0.0
        %830 = vmatpush1.xpose.msra.mxu0 0.0
        %831 = vmatprep.subr.mxu0 0.0
        %832 = vmatpush1.xpose.msra.mxu0 0.0
        %833 = vmatprep.subr.mxu0 0.0
        %834 = vmatpush1.xpose.msra.mxu0 0.0
        %835 = vmatprep.subr.mxu0 0.0
        %836 = vmatpush1.xpose.msra.mxu0 0.0
        %837 = vmatprep.subr.mxu0 0.0
        %838 = vmatpush1.xpose.msra.mxu0 0.0
        %839 = vmatprep.subr.mxu0 0.0
        %840 = vmatpush1.xpose.msra.mxu0 0.0
        %841 = vmatprep.subr.mxu0 0.0
        %842 = vmatpush1.xpose.msra.mxu0 0.0
        %843 = vmatprep.subr.mxu0 0.0
        %844 = vmatpush1.xpose.msra.mxu0 0.0
        %845 = vmatprep.subr.mxu0 0.0
        %846 = vmatpush1.xpose.msra.mxu0 0.0
        %847 = vmatprep.subr.mxu0 0.0
        %848 = vmatpush1.xpose.msra.mxu0 0.0
        %849 = vmatprep.subr.mxu0 0.0
        %850 = vmatpush1.xpose.msra.mxu0 0.0
        %851 = vmatprep.subr.mxu0 0.0
        %852 = vmatpush1.xpose.msra.mxu0 0.0
        %853 = vmatprep.subr.mxu0 0.0
        %854 = vmatpush1.xpose.msra.mxu0 0.0
        %855 = vmatprep.subr.mxu0 0.0
        %856 = vmatpush1.xpose.msra.mxu0 0.0
        %857 = vmatprep.subr.mxu0 0.0
        %858 = vmatpush1.xpose.msra.mxu0 0.0
        %859 = vmatprep.subr.mxu0 0.0
        %860 = vmatpush1.xpose.msra.mxu0 0.0
        %861 = vmatprep.subr.mxu0 0.0
        %862 = vmatpush1.xpose.msra.mxu0 0.0
        %863 = vmatprep.mubr.f32.mxu0 0.0
        %864 = vmatmul.mubr.f32.gmra.mrb[0].mxu0 %v795
        %v865 = vpop.f32.mrb[0].mxu0
        %v866 = vadd.f32 0.0, %v865
        %v867 = vpop.f32.mrb[0].mxu0
        %868 = vdwg.mxu0
        %869 = vrot.lane.b32.xlu0 %v705, 96
        %v870 = vpop.permute.xlu0 %869
        %v872 = vsel %vm716, %v712, 0
        %v874 = vsel %vm716, %v870, 0
        %876 = vmatprep.subr.mxu0 0.0
        %877 = vmatpush1.xpose.msra.mxu0 %v874
        %878 = vmatprep.subr.mxu0 0.0
        %879 = vmatpush1.xpose.msra.mxu0 0.0
        %880 = vmatprep.subr.mxu0 0.0
        %881 = vmatpush1.xpose.msra.mxu0 0.0
        %882 = vmatprep.subr.mxu0 0.0
        %883 = vmatpush1.xpose.msra.mxu0 0.0
        %884 = vmatprep.subr.mxu0 0.0
        %885 = vmatpush1.xpose.msra.mxu0 0.0
        %886 = vmatprep.subr.mxu0 0.0
        %887 = vmatpush1.xpose.msra.mxu0 0.0
        %888 = vmatprep.subr.mxu0 0.0
        %889 = vmatpush1.xpose.msra.mxu0 0.0
        %890 = vmatprep.subr.mxu0 0.0
        %891 = vmatpush1.xpose.msra.mxu0 0.0
        %892 = vmatprep.subr.mxu0 0.0
        %893 = vmatpush1.xpose.msra.mxu0 0.0
        %894 = vmatprep.subr.mxu0 0.0
        %895 = vmatpush1.xpose.msra.mxu0 0.0
        %896 = vmatprep.subr.mxu0 0.0
        %897 = vmatpush1.xpose.msra.mxu0 0.0
        %898 = vmatprep.subr.mxu0 0.0
        %899 = vmatpush1.xpose.msra.mxu0 0.0
        %900 = vmatprep.subr.mxu0 0.0
        %901 = vmatpush1.xpose.msra.mxu0 0.0
        %902 = vmatprep.subr.mxu0 0.0
        %903 = vmatpush1.xpose.msra.mxu0 0.0
        %904 = vmatprep.subr.mxu0 0.0
        %905 = vmatpush1.xpose.msra.mxu0 0.0
        %906 = vmatprep.subr.mxu0 0.0
        %907 = vmatpush1.xpose.msra.mxu0 0.0
        %908 = vmatprep.subr.mxu0 0.0
        %909 = vmatpush1.xpose.msra.mxu0 0.0
        %910 = vmatprep.subr.mxu0 0.0
        %911 = vmatpush1.xpose.msra.mxu0 0.0
        %912 = vmatprep.subr.mxu0 0.0
        %913 = vmatpush1.xpose.msra.mxu0 0.0
        %914 = vmatprep.subr.mxu0 0.0
        %915 = vmatpush1.xpose.msra.mxu0 0.0
        %916 = vmatprep.subr.mxu0 0.0
        %917 = vmatpush1.xpose.msra.mxu0 0.0
        %918 = vmatprep.subr.mxu0 0.0
        %919 = vmatpush1.xpose.msra.mxu0 0.0
        %920 = vmatprep.subr.mxu0 0.0
        %921 = vmatpush1.xpose.msra.mxu0 0.0
        %922 = vmatprep.subr.mxu0 0.0
        %923 = vmatpush1.xpose.msra.mxu0 0.0
        %924 = vmatprep.subr.mxu0 0.0
        %925 = vmatpush1.xpose.msra.mxu0 0.0
        %926 = vmatprep.subr.mxu0 0.0
        %927 = vmatpush1.xpose.msra.mxu0 0.0
        %928 = vmatprep.subr.mxu0 0.0
        %929 = vmatpush1.xpose.msra.mxu0 0.0
        %930 = vmatprep.subr.mxu0 0.0
        %931 = vmatpush1.xpose.msra.mxu0 0.0
        %932 = vmatprep.subr.mxu0 0.0
        %933 = vmatpush1.xpose.msra.mxu0 0.0
        %934 = vmatprep.subr.mxu0 0.0
        %935 = vmatpush1.xpose.msra.mxu0 0.0
        %936 = vmatprep.subr.mxu0 0.0
        %937 = vmatpush1.xpose.msra.mxu0 0.0
        %938 = vmatprep.subr.mxu0 0.0
        %939 = vmatpush1.xpose.msra.mxu0 0.0
        %940 = vmatprep.mubr.f32.mxu0 0.0
        %941 = vmatmul.mubr.f32.gmra.mrb[0].mxu0 %v872
        %v942 = vpop.f32.mrb[0].mxu0
        %v943 = vadd.f32 0.0, %v942
        %v944 = vpop.f32.mrb[0].mxu0
        %945 = vdwg.mxu0
        %946 = vrot.lane.b32.xlu0 %v708, 96
        %v947 = vpop.permute.xlu0 %946
        %v949 = vsel %vm716, %v713, 0
        %v951 = vsel %vm716, %v947, 0
        %953 = vmatprep.subr.mxu0 0.0
        %954 = vmatpush1.xpose.msra.mxu0 %v951
        %955 = vmatprep.subr.mxu0 0.0
        %956 = vmatpush1.xpose.msra.mxu0 0.0
        %957 = vmatprep.subr.mxu0 0.0
        %958 = vmatpush1.xpose.msra.mxu0 0.0
        %959 = vmatprep.subr.mxu0 0.0
        %960 = vmatpush1.xpose.msra.mxu0 0.0
        %961 = vmatprep.subr.mxu0 0.0
        %962 = vmatpush1.xpose.msra.mxu0 0.0
        %963 = vmatprep.subr.mxu0 0.0
        %964 = vmatpush1.xpose.msra.mxu0 0.0
        %965 = vmatprep.subr.mxu0 0.0
        %966 = vmatpush1.xpose.msra.mxu0 0.0
        %967 = vmatprep.subr.mxu0 0.0
        %968 = vmatpush1.xpose.msra.mxu0 0.0
        %969 = vmatprep.subr.mxu0 0.0
        %970 = vmatpush1.xpose.msra.mxu0 0.0
        %971 = vmatprep.subr.mxu0 0.0
        %972 = vmatpush1.xpose.msra.mxu0 0.0
        %973 = vmatprep.subr.mxu0 0.0
        %974 = vmatpush1.xpose.msra.mxu0 0.0
        %975 = vmatprep.subr.mxu0 0.0
        %976 = vmatpush1.xpose.msra.mxu0 0.0
        %977 = vmatprep.subr.mxu0 0.0
        %978 = vmatpush1.xpose.msra.mxu0 0.0
        %979 = vmatprep.subr.mxu0 0.0
        %980 = vmatpush1.xpose.msra.mxu0 0.0
        %981 = vmatprep.subr.mxu0 0.0
        %982 = vmatpush1.xpose.msra.mxu0 0.0
        %983 = vmatprep.subr.mxu0 0.0
        %984 = vmatpush1.xpose.msra.mxu0 0.0
        %985 = vmatprep.subr.mxu0 0.0
        %986 = vmatpush1.xpose.msra.mxu0 0.0
        %987 = vmatprep.subr.mxu0 0.0
        %988 = vmatpush1.xpose.msra.mxu0 0.0
        %989 = vmatprep.subr.mxu0 0.0
        %990 = vmatpush1.xpose.msra.mxu0 0.0
        %991 = vmatprep.subr.mxu0 0.0
        %992 = vmatpush1.xpose.msra.mxu0 0.0
        %993 = vmatprep.subr.mxu0 0.0
        %994 = vmatpush1.xpose.msra.mxu0 0.0
        %995 = vmatprep.subr.mxu0 0.0
        %996 = vmatpush1.xpose.msra.mxu0 0.0
        %997 = vmatprep.subr.mxu0 0.0
        %998 = vmatpush1.xpose.msra.mxu0 0.0
        %999 = vmatprep.subr.mxu0 0.0
        %1000 = vmatpush1.xpose.msra.mxu0 0.0
        %1001 = vmatprep.subr.mxu0 0.0
        %1002 = vmatpush1.xpose.msra.mxu0 0.0
        %1003 = vmatprep.subr.mxu0 0.0
        %1004 = vmatpush1.xpose.msra.mxu0 0.0
        %1005 = vmatprep.subr.mxu0 0.0
        %1006 = vmatpush1.xpose.msra.mxu0 0.0
        %1007 = vmatprep.subr.mxu0 0.0
        %1008 = vmatpush1.xpose.msra.mxu0 0.0
        %1009 = vmatprep.subr.mxu0 0.0
        %1010 = vmatpush1.xpose.msra.mxu0 0.0
        %1011 = vmatprep.subr.mxu0 0.0
        %1012 = vmatpush1.xpose.msra.mxu0 0.0
        %1013 = vmatprep.subr.mxu0 0.0
        %1014 = vmatpush1.xpose.msra.mxu0 0.0
        %1015 = vmatprep.subr.mxu0 0.0
        %1016 = vmatpush1.xpose.msra.mxu0 0.0
        %1017 = vmatprep.mubr.f32.mxu0 0.0
        %1018 = vmatmul.mubr.f32.gmra.mrb[0].mxu0 %v949
        %v1019 = vpop.f32.mrb[0].mxu0
        %v1020 = vadd.f32 0.0, %v1019
        %v1021 = vpop.f32.mrb[0].mxu0
        %1022 = vdwg.mxu0
        %v1023 = vsel %vm716, %v789, -inf
        %1024 = vmax.xlane.f32.xlu0 %v1023
        %v1025 = vpop.xlane.xlu0 %1024
        %v1026 = vsel %vm716, %v866, -inf
        %1027 = vmax.xlane.f32.xlu0 %v1026
        %v1028 = vpop.xlane.xlu0 %1027
        %v1029 = vsel %vm716, %v943, -inf
        %1030 = vmax.xlane.f32.xlu0 %v1029
        %v1031 = vpop.xlane.xlu0 %1030
        %v1032 = vsel %vm716, %v1020, -inf
        %1033 = vmax.xlane.f32.xlu0 %v1032
        %v1034 = vpop.xlane.xlu0 %1033
        %v1035 = vsub.f32 %v789, %v1025
        %v1036 = vsub.f32 %v866, %v1028
        %v1037 = vsub.f32 %v943, %v1031
        %v1038 = vsub.f32 %v1020, %v1034
        %v1039 = vmul.f32 %v1035, 1.442695
        %v1040 = vpow.pop %v1039
        %v1041 = vmul.f32 %v1036, 1.442695
        %v1042 = vpow.pop %v1041
        %v1043 = vmul.f32 %v1037, 1.442695
        %v1044 = vpow.pop %v1043
        %v1045 = vmul.f32 %v1038, 1.442695
        %v1046 = vpow.pop %v1045
        %v1047 = vsel %vm716, %v1040, 0.0
        %1048 = vadd.xlane.f32.xlu0 %v1047
        %v1049 = vpop.xlane.xlu0 %1048
        %v1050 = vsel %vm716, %v1042, 0.0
        %1051 = vadd.xlane.f32.xlu0 %v1050
        %v1052 = vpop.xlane.xlu0 %1051
        %v1053 = vsel %vm716, %v1044, 0.0
        %1054 = vadd.xlane.f32.xlu0 %v1053
        %v1055 = vpop.xlane.xlu0 %1054
        %v1056 = vsel %vm716, %v1046, 0.0
        %1057 = vadd.xlane.f32.xlu0 %v1056
        %v1058 = vpop.xlane.xlu0 %1057
        %v1059 = vrcp.pop %v1049
        %v1060 = vrcp.pop %v1052
        %v1061 = vrcp.pop %v1055
        %v1062 = vrcp.pop %v1058
        %v1063 = vmul.f32 %v1040, %v1059
        %v1064 = vmul.f32 %v1042, %v1060
        %v1065 = vmul.f32 %v1044, %v1061
        %v1066 = vmul.f32 %v1046, %v1062
        %1067 = vrot.lane.b32.xlu0 %v697, 64
        %v1068 = vpop.permute.xlu0 %1067
        %v1071 = vsel %vm716, %v1063, 0
        %1073 = vmatprep.subr.mxu0 0.0
        %1074 = vmatpush1.msra.mxu0 %v1068
        %1075 = vmatprep.subr.mxu0 0.0
        %1076 = vmatpush1.msra.mxu0 0.0
        %1077 = vmatprep.subr.mxu0 0.0
        %1078 = vmatpush1.msra.mxu0 0.0
        %1079 = vmatprep.subr.mxu0 0.0
        %1080 = vmatpush1.msra.mxu0 0.0
        %1081 = vmatprep.subr.mxu0 0.0
        %1082 = vmatpush1.msra.mxu0 0.0
        %1083 = vmatprep.subr.mxu0 0.0
        %1084 = vmatpush1.msra.mxu0 0.0
        %1085 = vmatprep.subr.mxu0 0.0
        %1086 = vmatpush1.msra.mxu0 0.0
        %1087 = vmatprep.subr.mxu0 0.0
        %1088 = vmatpush1.msra.mxu0 0.0
        %1089 = vmatprep.subr.mxu0 0.0
        %1090 = vmatpush1.msra.mxu0 0.0
        %1091 = vmatprep.subr.mxu0 0.0
        %1092 = vmatpush1.msra.mxu0 0.0
        %1093 = vmatprep.subr.mxu0 0.0
        %1094 = vmatpush1.msra.mxu0 0.0
        %1095 = vmatprep.subr.mxu0 0.0
        %1096 = vmatpush1.msra.mxu0 0.0
        %1097 = vmatprep.subr.mxu0 0.0
        %1098 = vmatpush1.msra.mxu0 0.0
        %1099 = vmatprep.subr.mxu0 0.0
        %1100 = vmatpush1.msra.mxu0 0.0
        %1101 = vmatprep.subr.mxu0 0.0
        %1102 = vmatpush1.msra.mxu0 0.0
        %1103 = vmatprep.subr.mxu0 0.0
        %1104 = vmatpush1.msra.mxu0 0.0
        %1105 = vmatprep.subr.mxu0 0.0
        %1106 = vmatpush1.msra.mxu0 0.0
        %1107 = vmatprep.subr.mxu0 0.0
        %1108 = vmatpush1.msra.mxu0 0.0
        %1109 = vmatprep.subr.mxu0 0.0
        %1110 = vmatpush1.msra.mxu0 0.0
        %1111 = vmatprep.subr.mxu0 0.0
        %1112 = vmatpush1.msra.mxu0 0.0
        %1113 = vmatprep.subr.mxu0 0.0
        %1114 = vmatpush1.msra.mxu0 0.0
        %1115 = vmatprep.subr.mxu0 0.0
        %1116 = vmatpush1.msra.mxu0 0.0
        %1117 = vmatprep.subr.mxu0 0.0
        %1118 = vmatpush1.msra.mxu0 0.0
        %1119 = vmatprep.subr.mxu0 0.0
        %1120 = vmatpush1.msra.mxu0 0.0
        %1121 = vmatprep.subr.mxu0 0.0
        %1122 = vmatpush1.msra.mxu0 0.0
        %1123 = vmatprep.subr.mxu0 0.0
        %1124 = vmatpush1.msra.mxu0 0.0
        %1125 = vmatprep.subr.mxu0 0.0
        %1126 = vmatpush1.msra.mxu0 0.0
        %1127 = vmatprep.subr.mxu0 0.0
        %1128 = vmatpush1.msra.mxu0 0.0
        %1129 = vmatprep.subr.mxu0 0.0
        %1130 = vmatpush1.msra.mxu0 0.0
        %1131 = vmatprep.subr.mxu0 0.0
        %1132 = vmatpush1.msra.mxu0 0.0
        %1133 = vmatprep.subr.mxu0 0.0
        %1134 = vmatpush1.msra.mxu0 0.0
        %1135 = vmatprep.subr.mxu0 0.0
        %1136 = vmatpush1.msra.mxu0 0.0
        %1137 = vmatprep.mubr.f32.mxu0 0.0
        %1138 = vmatmul.mubr.f32.gmra.mrb[0].mxu0 %v1071
        %v1139 = vpop.f32.mrb[0].mxu0
        %v1140 = vadd.f32 0.0, %v1139
        %v1141 = vpop.f32.mrb[0].mxu0
        %1142 = vdwg.mxu0
        %1143 = vrot.lane.b32.xlu0 %v702, 64
        %v1144 = vpop.permute.xlu0 %1143
        %v1147 = vsel %vm716, %v1064, 0
        %1149 = vmatprep.subr.mxu0 0.0
        %1150 = vmatpush1.msra.mxu0 %v1144
        %1151 = vmatprep.subr.mxu0 0.0
        %1152 = vmatpush1.msra.mxu0 0.0
        %1153 = vmatprep.subr.mxu0 0.0
        %1154 = vmatpush1.msra.mxu0 0.0
        %1155 = vmatprep.subr.mxu0 0.0
        %1156 = vmatpush1.msra.mxu0 0.0
        %1157 = vmatprep.subr.mxu0 0.0
        %1158 = vmatpush1.msra.mxu0 0.0
        %1159 = vmatprep.subr.mxu0 0.0
        %1160 = vmatpush1.msra.mxu0 0.0
        %1161 = vmatprep.subr.mxu0 0.0
        %1162 = vmatpush1.msra.mxu0 0.0
        %1163 = vmatprep.subr.mxu0 0.0
        %1164 = vmatpush1.msra.mxu0 0.0
        %1165 = vmatprep.subr.mxu0 0.0
        %1166 = vmatpush1.msra.mxu0 0.0
        %1167 = vmatprep.subr.mxu0 0.0
        %1168 = vmatpush1.msra.mxu0 0.0
        %1169 = vmatprep.subr.mxu0 0.0
        %1170 = vmatpush1.msra.mxu0 0.0
        %1171 = vmatprep.subr.mxu0 0.0
        %1172 = vmatpush1.msra.mxu0 0.0
        %1173 = vmatprep.subr.mxu0 0.0
        %1174 = vmatpush1.msra.mxu0 0.0
        %1175 = vmatprep.subr.mxu0 0.0
        %1176 = vmatpush1.msra.mxu0 0.0
        %1177 = vmatprep.subr.mxu0 0.0
        %1178 = vmatpush1.msra.mxu0 0.0
        %1179 = vmatprep.subr.mxu0 0.0
        %1180 = vmatpush1.msra.mxu0 0.0
        %1181 = vmatprep.subr.mxu0 0.0
        %1182 = vmatpush1.msra.mxu0 0.0
        %1183 = vmatprep.subr.mxu0 0.0
        %1184 = vmatpush1.msra.mxu0 0.0
        %1185 = vmatprep.subr.mxu0 0.0
        %1186 = vmatpush1.msra.mxu0 0.0
        %1187 = vmatprep.subr.mxu0 0.0
        %1188 = vmatpush1.msra.mxu0 0.0
        %1189 = vmatprep.subr.mxu0 0.0
        %1190 = vmatpush1.msra.mxu0 0.0
        %1191 = vmatprep.subr.mxu0 0.0
        %1192 = vmatpush1.msra.mxu0 0.0
        %1193 = vmatprep.subr.mxu0 0.0
        %1194 = vmatpush1.msra.mxu0 0.0
        %1195 = vmatprep.subr.mxu0 0.0
        %1196 = vmatpush1.msra.mxu0 0.0
        %1197 = vmatprep.subr.mxu0 0.0
        %1198 = vmatpush1.msra.mxu0 0.0
        %1199 = vmatprep.subr.mxu0 0.0
        %1200 = vmatpush1.msra.mxu0 0.0
        %1201 = vmatprep.subr.mxu0 0.0
        %1202 = vmatpush1.msra.mxu0 0.0
        %1203 = vmatprep.subr.mxu0 0.0
        %1204 = vmatpush1.msra.mxu0 0.0
        %1205 = vmatprep.subr.mxu0 0.0
        %1206 = vmatpush1.msra.mxu0 0.0
        %1207 = vmatprep.subr.mxu0 0.0
        %1208 = vmatpush1.msra.mxu0 0.0
        %1209 = vmatprep.subr.mxu0 0.0
        %1210 = vmatpush1.msra.mxu0 0.0
        %1211 = vmatprep.subr.mxu0 0.0
        %1212 = vmatpush1.msra.mxu0 0.0
        %1213 = vmatprep.mubr.f32.mxu0 0.0
        %1214 = vmatmul.mubr.f32.gmra.mrb[0].mxu0 %v1147
        %v1215 = vpop.f32.mrb[0].mxu0
        %v1216 = vadd.f32 0.0, %v1215
        %v1217 = vpop.f32.mrb[0].mxu0
        %1218 = vdwg.mxu0
        %1219 = vrot.lane.b32.xlu0 %v705, 64
        %v1220 = vpop.permute.xlu0 %1219
        %v1223 = vsel %vm716, %v1065, 0
        %1225 = vmatprep.subr.mxu0 0.0
        %1226 = vmatpush1.msra.mxu0 %v1220
        %1227 = vmatprep.subr.mxu0 0.0
        %1228 = vmatpush1.msra.mxu0 0.0
        %1229 = vmatprep.subr.mxu0 0.0
        %1230 = vmatpush1.msra.mxu0 0.0
        %1231 = vmatprep.subr.mxu0 0.0
        %1232 = vmatpush1.msra.mxu0 0.0
        %1233 = vmatprep.subr.mxu0 0.0
        %1234 = vmatpush1.msra.mxu0 0.0
        %1235 = vmatprep.subr.mxu0 0.0
        %1236 = vmatpush1.msra.mxu0 0.0
        %1237 = vmatprep.subr.mxu0 0.0
        %1238 = vmatpush1.msra.mxu0 0.0
        %1239 = vmatprep.subr.mxu0 0.0
        %1240 = vmatpush1.msra.mxu0 0.0
        %1241 = vmatprep.subr.mxu0 0.0
        %1242 = vmatpush1.msra.mxu0 0.0
        %1243 = vmatprep.subr.mxu0 0.0
        %1244 = vmatpush1.msra.mxu0 0.0
        %1245 = vmatprep.subr.mxu0 0.0
        %1246 = vmatpush1.msra.mxu0 0.0
        %1247 = vmatprep.subr.mxu0 0.0
        %1248 = vmatpush1.msra.mxu0 0.0
        %1249 = vmatprep.subr.mxu0 0.0
        %1250 = vmatpush1.msra.mxu0 0.0
        %1251 = vmatprep.subr.mxu0 0.0
        %1252 = vmatpush1.msra.mxu0 0.0
        %1253 = vmatprep.subr.mxu0 0.0
        %1254 = vmatpush1.msra.mxu0 0.0
        %1255 = vmatprep.subr.mxu0 0.0
        %1256 = vmatpush1.msra.mxu0 0.0
        %1257 = vmatprep.subr.mxu0 0.0
        %1258 = vmatpush1.msra.mxu0 0.0
        %1259 = vmatprep.subr.mxu0 0.0
        %1260 = vmatpush1.msra.mxu0 0.0
        %1261 = vmatprep.subr.mxu0 0.0
        %1262 = vmatpush1.msra.mxu0 0.0
        %1263 = vmatprep.subr.mxu0 0.0
        %1264 = vmatpush1.msra.mxu0 0.0
        %1265 = vmatprep.subr.mxu0 0.0
        %1266 = vmatpush1.msra.mxu0 0.0
        %1267 = vmatprep.subr.mxu0 0.0
        %1268 = vmatpush1.msra.mxu0 0.0
        %1269 = vmatprep.subr.mxu0 0.0
        %1270 = vmatpush1.msra.mxu0 0.0
        %1271 = vmatprep.subr.mxu0 0.0
        %1272 = vmatpush1.msra.mxu0 0.0
        %1273 = vmatprep.subr.mxu0 0.0
        %1274 = vmatpush1.msra.mxu0 0.0
        %1275 = vmatprep.subr.mxu0 0.0
        %1276 = vmatpush1.msra.mxu0 0.0
        %1277 = vmatprep.subr.mxu0 0.0
        %1278 = vmatpush1.msra.mxu0 0.0
        %1279 = vmatprep.subr.mxu0 0.0
        %1280 = vmatpush1.msra.mxu0 0.0
        %1281 = vmatprep.subr.mxu0 0.0
        %1282 = vmatpush1.msra.mxu0 0.0
        %1283 = vmatprep.subr.mxu0 0.0
        %1284 = vmatpush1.msra.mxu0 0.0
        %1285 = vmatprep.subr.mxu0 0.0
        %1286 = vmatpush1.msra.mxu0 0.0
        %1287 = vmatprep.subr.mxu0 0.0
        %1288 = vmatpush1.msra.mxu0 0.0
        %1289 = vmatprep.mubr.f32.mxu0 0.0
        %1290 = vmatmul.mubr.f32.gmra.mrb[0].mxu0 %v1223
        %v1291 = vpop.f32.mrb[0].mxu0
        %v1292 = vadd.f32 0.0, %v1291
        %v1293 = vpop.f32.mrb[0].mxu0
        %1294 = vdwg.mxu0
        %1295 = vrot.lane.b32.xlu0 %v708, 64
        %v1296 = vpop.permute.xlu0 %1295
        %v1299 = vsel %vm716, %v1066, 0
        %1301 = vmatprep.subr.mxu0 0.0
        %1302 = vmatpush1.msra.mxu0 %v1296
        %1303 = vmatprep.subr.mxu0 0.0
        %1304 = vmatpush1.msra.mxu0 0.0
        %1305 = vmatprep.subr.mxu0 0.0
        %1306 = vmatpush1.msra.mxu0 0.0
        %1307 = vmatprep.subr.mxu0 0.0
        %1308 = vmatpush1.msra.mxu0 0.0
        %1309 = vmatprep.subr.mxu0 0.0
        %1310 = vmatpush1.msra.mxu0 0.0
        %1311 = vmatprep.subr.mxu0 0.0
        %1312 = vmatpush1.msra.mxu0 0.0
        %1313 = vmatprep.subr.mxu0 0.0
        %1314 = vmatpush1.msra.mxu0 0.0
        %1315 = vmatprep.subr.mxu0 0.0
        %1316 = vmatpush1.msra.mxu0 0.0
        %1317 = vmatprep.subr.mxu0 0.0
        %1318 = vmatpush1.msra.mxu0 0.0
        %1319 = vmatprep.subr.mxu0 0.0
        %1320 = vmatpush1.msra.mxu0 0.0
        %1321 = vmatprep.subr.mxu0 0.0
        %1322 = vmatpush1.msra.mxu0 0.0
        %1323 = vmatprep.subr.mxu0 0.0
        %1324 = vmatpush1.msra.mxu0 0.0
        %1325 = vmatprep.subr.mxu0 0.0
        %1326 = vmatpush1.msra.mxu0 0.0
        %1327 = vmatprep.subr.mxu0 0.0
        %1328 = vmatpush1.msra.mxu0 0.0
        %1329 = vmatprep.subr.mxu0 0.0
        %1330 = vmatpush1.msra.mxu0 0.0
        %1331 = vmatprep.subr.mxu0 0.0
        %1332 = vmatpush1.msra.mxu0 0.0
        %1333 = vmatprep.subr.mxu0 0.0
        %1334 = vmatpush1.msra.mxu0 0.0
        %1335 = vmatprep.subr.mxu0 0.0
        %1336 = vmatpush1.msra.mxu0 0.0
        %1337 = vmatprep.subr.mxu0 0.0
        %1338 = vmatpush1.msra.mxu0 0.0
        %1339 = vmatprep.subr.mxu0 0.0
        %1340 = vmatpush1.msra.mxu0 0.0
        %1341 = vmatprep.subr.mxu0 0.0
        %1342 = vmatpush1.msra.mxu0 0.0
        %1343 = vmatprep.subr.mxu0 0.0
        %1344 = vmatpush1.msra.mxu0 0.0
        %1345 = vmatprep.subr.mxu0 0.0
        %1346 = vmatpush1.msra.mxu0 0.0
        %1347 = vmatprep.subr.mxu0 0.0
        %1348 = vmatpush1.msra.mxu0 0.0
        %1349 = vmatprep.subr.mxu0 0.0
        %1350 = vmatpush1.msra.mxu0 0.0
        %1351 = vmatprep.subr.mxu0 0.0
        %1352 = vmatpush1.msra.mxu0 0.0
        %1353 = vmatprep.subr.mxu0 0.0
        %1354 = vmatpush1.msra.mxu0 0.0
        %1355 = vmatprep.subr.mxu0 0.0
        %1356 = vmatpush1.msra.mxu0 0.0
        %1357 = vmatprep.subr.mxu0 0.0
        %1358 = vmatpush1.msra.mxu0 0.0
        %1359 = vmatprep.subr.mxu0 0.0
        %1360 = vmatpush1.msra.mxu0 0.0
        %1361 = vmatprep.subr.mxu0 0.0
        %1362 = vmatpush1.msra.mxu0 0.0
        %1363 = vmatprep.subr.mxu0 0.0
        %1364 = vmatpush1.msra.mxu0 0.0
        %1365 = vmatprep.mubr.f32.mxu0 0.0
        %1366 = vmatmul.mubr.f32.gmra.mrb[0].mxu0 %v1299
        %v1367 = vpop.f32.mrb[0].mxu0
        %v1368 = vadd.f32 0.0, %v1367
        %v1369 = vpop.f32.mrb[0].mxu0
        %1370 = vdwg.mxu0
        %1372 = vrot.lane.b32.xlu0 %v1216, 8
        %v1373 = vpop.permute.xlu0 %1372
        %1376 = vrot.lane.b32.xlu0 %v1292, 16
        %v1377 = vpop.permute.xlu0 %1376
        %1380 = vrot.lane.b32.xlu0 %v1368, 24
        %v1381 = vpop.permute.xlu0 %1380
        %v1383 = vsel %vm716, %v1140, %v1373
        %vm1384 = vcmask 130048
        %v1385 = vsel %vm1384, %v1383, %v1377
        %vm1386 = vcmask 195584
        %v1387 = vsel %vm1386, %v1385, %v1381
        %v1388 = vld [vmem:[#allocation8] sm:$0xff]
        %v1389 = vld [vmem:[#allocation8 + $0x8] sm:$0xff]
        %v1390 = vld [vmem:[#allocation8 + $0x10] sm:$0xff]
        %v1391 = vld [vmem:[#allocation8 + $0x18] sm:$0xff]
        %v1392 = vld [vmem:[#allocation10] sm:$0x1]
        %v1394 = vlaneseq
        %v1395 = vshrl.u32 %v1394, 7
        %v1396 = vsub.s32 0, %v1395
        %v1397 = vrot.slane %v1392, %v1396
        %v1400 = vsel %vm626, %v1387, 0
        %1402 = vmatprep.subr.mxu0 0.0
        %1403 = vmatpush1.msra.mxu0 %v1388
        %1404 = vmatprep.subr.mxu0 0.0
        %1405 = vmatpush1.msra.mxu0 %v1389
        %1406 = vmatprep.subr.mxu0 0.0
        %1407 = vmatpush1.msra.mxu0 %v1390
        %1408 = vmatprep.subr.mxu0 0.0
        %1409 = vmatpush1.msra.mxu0 %v1391
        %1410 = vmatprep.subr.mxu0 0.0
        %1411 = vmatpush1.msra.mxu0 0.0
        %1412 = vmatprep.subr.mxu0 0.0
        %1413 = vmatpush1.msra.mxu0 0.0
        %1414 = vmatprep.subr.mxu0 0.0
        %1415 = vmatpush1.msra.mxu0 0.0
        %1416 = vmatprep.subr.mxu0 0.0
        %1417 = vmatpush1.msra.mxu0 0.0
        %1418 = vmatprep.subr.mxu0 0.0
        %1419 = vmatpush1.msra.mxu0 0.0
        %1420 = vmatprep.subr.mxu0 0.0
        %1421 = vmatpush1.msra.mxu0 0.0
        %1422 = vmatprep.subr.mxu0 0.0
        %1423 = vmatpush1.msra.mxu0 0.0
        %1424 = vmatprep.subr.mxu0 0.0
        %1425 = vmatpush1.msra.mxu0 0.0
        %1426 = vmatprep.subr.mxu0 0.0
        %1427 = vmatpush1.msra.mxu0 0.0
        %1428 = vmatprep.subr.mxu0 0.0
        %1429 = vmatpush1.msra.mxu0 0.0
        %1430 = vmatprep.subr.mxu0 0.0
        %1431 = vmatpush1.msra.mxu0 0.0
        %1432 = vmatprep.subr.mxu0 0.0
        %1433 = vmatpush1.msra.mxu0 0.0
        %1434 = vmatprep.subr.mxu0 0.0
        %1435 = vmatpush1.msra.mxu0 0.0
        %1436 = vmatprep.subr.mxu0 0.0
        %1437 = vmatpush1.msra.mxu0 0.0
        %1438 = vmatprep.subr.mxu0 0.0
        %1439 = vmatpush1.msra.mxu0 0.0
        %1440 = vmatprep.subr.mxu0 0.0
        %1441 = vmatpush1.msra.mxu0 0.0
        %1442 = vmatprep.subr.mxu0 0.0
        %1443 = vmatpush1.msra.mxu0 0.0
        %1444 = vmatprep.subr.mxu0 0.0
        %1445 = vmatpush1.msra.mxu0 0.0
        %1446 = vmatprep.subr.mxu0 0.0
        %1447 = vmatpush1.msra.mxu0 0.0
        %1448 = vmatprep.subr.mxu0 0.0
        %1449 = vmatpush1.msra.mxu0 0.0
        %1450 = vmatprep.subr.mxu0 0.0
        %1451 = vmatpush1.msra.mxu0 0.0
        %1452 = vmatprep.subr.mxu0 0.0
        %1453 = vmatpush1.msra.mxu0 0.0
        %1454 = vmatprep.subr.mxu0 0.0
        %1455 = vmatpush1.msra.mxu0 0.0
        %1456 = vmatprep.subr.mxu0 0.0
        %1457 = vmatpush1.msra.mxu0 0.0
        %1458 = vmatprep.subr.mxu0 0.0
        %1459 = vmatpush1.msra.mxu0 0.0
        %1460 = vmatprep.subr.mxu0 0.0
        %1461 = vmatpush1.msra.mxu0 0.0
        %1462 = vmatprep.subr.mxu0 0.0
        %1463 = vmatpush1.msra.mxu0 0.0
        %1464 = vmatprep.subr.mxu0 0.0
        %1465 = vmatpush1.msra.mxu0 0.0
        %1466 = vmatprep.mubr.f32.mxu0 0.0
        %1467 = vmatmul.mubr.f32.gmra.mrb[0].mxu0 %v1400
        %v1468 = vpop.f32.mrb[0].mxu0
        %v1469 = vadd.f32 %v1397, %v1468
        %v1470 = vpop.f32.mrb[0].mxu0
        %1471 = vdwg.mxu0
        %v1472 = vadd.f32 %v614, %v1469
        %v1473 = vsel %vm626, %v1472, 0.0
        %1474 = vadd.xlane.f32.xlu0 %v1473
        %v1475 = vpop.xlane.xlu0 %1474
        %v1476 = vrcp.pop 32.0
        %v1477 = vmul.f32 %v1475, %v1476
        %v1478 = vsub.f32 %v1472, %v1477
        %v1479 = vmul.f32 %v1478, %v1478
        %v1480 = vsel %vm626, %v1479, 0.0
        %1481 = vadd.xlane.f32.xlu0 %v1480
        %v1482 = vpop.xlane.xlu0 %1481
        %v1483 = vmul.f32 %v1482, %v1476
        %v1484 = vadd.f32 %v1483, 1e-05
        %v1485 = vrsqrt.pop %v1484
        %v1486 = vmul.f32 %v1478, %v1485
        %v1487 = vld [vmem:[#allocation11] sm:$0x1]
        %v1489 = vlaneseq
        %v1490 = vshrl.u32 %v1489, 7
        %v1491 = vsub.s32 0, %v1490
        %v1492 = vrot.slane %v1487, %v1491
        %v1494 = vmul.f32 %v1486, %v1492
        %v1495 = vld [vmem:[#allocation13] sm:$0x1]
        %v1497 = vlaneseq
        %v1498 = vshrl.u32 %v1497, 7
        %v1499 = vsub.s32 0, %v1498
        %v1500 = vrot.slane %v1495, %v1499
        %v1502 = vadd.f32 %v1494, %v1500
        %v1503 = vld [vmem:[#allocation14] sm:$0xff]
        %v1504 = vld [vmem:[#allocation14 + $0x8] sm:$0xff]
        %v1505 = vld [vmem:[#allocation14 + $0x10] sm:$0xff]
        %v1506 = vld [vmem:[#allocation14 + $0x18] sm:$0xff]
        %v1507 = vld [vmem:[#allocation16] sm:$0x1]
        %v1509 = vlaneseq
        %v1510 = vshrl.u32 %v1509, 7
        %v1511 = vsub.s32 0, %v1510
        %v1512 = vrot.slane %v1507, %v1511
        %v1515 = vsel %vm626, %v1502, 0
        %1517 = vmatprep.subr.mxu0 0.0
        %1518 = vmatpush1.msra.mxu0 %v1503
        %1519 = vmatprep.subr.mxu0 0.0
        %1520 = vmatpush1.msra.mxu0 %v1504
        %1521 = vmatprep.subr.mxu0 0.0
        %1522 = vmatpush1.msra.mxu0 %v1505
        %1523 = vmatprep.subr.mxu0 0.0
        %1524 = vmatpush1.msra.mxu0 %v1506
        %1525 = vmatprep.subr.mxu0 0.0
        %1526 = vmatpush1.msra.mxu0 0.0
        %1527 = vmatprep.subr.mxu0 0.0
        %1528 = vmatpush1.msra.mxu0 0.0
        %1529 = vmatprep.subr.mxu0 0.0
        %1530 = vmatpush1.msra.mxu0 0.0
        %1531 = vmatprep.subr.mxu0 0.0
        %1532 = vmatpush1.msra.mxu0 0.0
        %1533 = vmatprep.subr.mxu0 0.0
        %1534 = vmatpush1.msra.mxu0 0.0
        %1535 = vmatprep.subr.mxu0 0.0
        %1536 = vmatpush1.msra.mxu0 0.0
        %1537 = vmatprep.subr.mxu0 0.0
        %1538 = vmatpush1.msra.mxu0 0.0
        %1539 = vmatprep.subr.mxu0 0.0
        %1540 = vmatpush1.msra.mxu0 0.0
        %1541 = vmatprep.subr.mxu0 0.0
        %1542 = vmatpush1.msra.mxu0 0.0
        %1543 = vmatprep.subr.mxu0 0.0
        %1544 = vmatpush1.msra.mxu0 0.0
        %1545 = vmatprep.subr.mxu0 0.0
        %1546 = vmatpush1.msra.mxu0 0.0
        %1547 = vmatprep.subr.mxu0 0.0
        %1548 = vmatpush1.msra.mxu0 0.0
        %1549 = vmatprep.subr.mxu0 0.0
        %1550 = vmatpush1.msra.mxu0 0.0
        %1551 = vmatprep.subr.mxu0 0.0
        %1552 = vmatpush1.msra.mxu0 0.0
        %1553 = vmatprep.subr.mxu0 0.0
        %1554 = vmatpush1.msra.mxu0 0.0
        %1555 = vmatprep.subr.mxu0 0.0
        %1556 = vmatpush1.msra.mxu0 0.0
        %1557 = vmatprep.subr.mxu0 0.0
        %1558 = vmatpush1.msra.mxu0 0.0
        %1559 = vmatprep.subr.mxu0 0.0
        %1560 = vmatpush1.msra.mxu0 0.0
        %1561 = vmatprep.subr.mxu0 0.0
        %1562 = vmatpush1.msra.mxu0 0.0
        %1563 = vmatprep.subr.mxu0 0.0
        %1564 = vmatpush1.msra.mxu0 0.0
        %1565 = vmatprep.subr.mxu0 0.0
        %1566 = vmatpush1.msra.mxu0 0.0
        %1567 = vmatprep.subr.mxu0 0.0
        %1568 = vmatpush1.msra.mxu0 0.0
        %1569 = vmatprep.subr.mxu0 0.0
        %1570 = vmatpush1.msra.mxu0 0.0
        %1571 = vmatprep.subr.mxu0 0.0
        %1572 = vmatpush1.msra.mxu0 0.0
        %1573 = vmatprep.subr.mxu0 0.0
        %1574 = vmatpush1.msra.mxu0 0.0
        %1575 = vmatprep.subr.mxu0 0.0
        %1576 = vmatpush1.msra.mxu0 0.0
        %1577 = vmatprep.subr.mxu0 0.0
        %1578 = vmatpush1.msra.mxu0 0.0
        %1579 = vmatprep.subr.mxu0 0.0
        %1580 = vmatpush1.msra.mxu0 0.0
        %1581 = vmatprep.mubr.f32.mxu0 0.0
        %1582 = vmatmul.mubr.f32.gmra.mrb[0].mxu0 %v1515
        %v1583 = vpop.f32.mrb[0].mxu0
        %v1584 = vadd.f32 %v1512, %v1583
        %v1585 = vpop.f32.mrb[0].mxu0
        %1586 = vdwg.mxu0
        %v1587 = vmul.f32 %v1584, 0.5
        %v1588 = vmul.f32 %v1584, 0.70710677
        %v1589 = verf.f32.pop %v1588
        %v1590 = vadd.f32 %v1589, 1.0
        %v1591 = vmul.f32 %v1587, %v1590
        %v1592 = vld [vmem:[#allocation17] sm:$0xff]
        %v1593 = vld [vmem:[#allocation17 + $0x8] sm:$0xff]
        %v1594 = vld [vmem:[#allocation17 + $0x10] sm:$0xff]
        %v1595 = vld [vmem:[#allocation17 + $0x18] sm:$0xff]
        %v1596 = vld [vmem:[#allocation17 + $0x20] sm:$0xff]
        %v1597 = vld [vmem:[#allocation17 + $0x28] sm:$0xff]
        %v1598 = vld [vmem:[#allocation17 + $0x30] sm:$0xff]
        %v1599 = vld [vmem:[#allocation17 + $0x38] sm:$0xff]
        %v1600 = vld [vmem:[#allocation19] sm:$0x1]
        %v1602 = vlaneseq
        %v1603 = vshrl.u32 %v1602, 7
        %v1604 = vsub.s32 0, %v1603
        %v1605 = vrot.slane %v1600, %v1604
        %vm1607 = vcmask 523264
        %v1609 = vsel %vm1607, %v1591, 0
        %1611 = vmatprep.subr.mxu0 0.0
        %1612 = vmatpush1.msra.mxu0 %v1592
        %1613 = vmatprep.subr.mxu0 0.0
        %1614 = vmatpush1.msra.mxu0 %v1593
        %1615 = vmatprep.subr.mxu0 0.0
        %1616 = vmatpush1.msra.mxu0 %v1594
        %1617 = vmatprep.subr.mxu0 0.0
        %1618 = vmatpush1.msra.mxu0 %v1595
        %1619 = vmatprep.subr.mxu0 0.0
        %1620 = vmatpush1.msra.mxu0 %v1596
        %1621 = vmatprep.subr.mxu0 0.0
        %1622 = vmatpush1.msra.mxu0 %v1597
        %1623 = vmatprep.subr.mxu0 0.0
        %1624 = vmatpush1.msra.mxu0 %v1598
        %1625 = vmatprep.subr.mxu0 0.0
        %1626 = vmatpush1.msra.mxu0 %v1599
        %1627 = vmatprep.subr.mxu0 0.0
        %1628 = vmatpush1.msra.mxu0 0.0
        %1629 = vmatprep.subr.mxu0 0.0
        %1630 = vmatpush1.msra.mxu0 0.0
        %1631 = vmatprep.subr.mxu0 0.0
        %1632 = vmatpush1.msra.mxu0 0.0
        %1633 = vmatprep.subr.mxu0 0.0
        %1634 = vmatpush1.msra.mxu0 0.0
        %1635 = vmatprep.subr.mxu0 0.0
        %1636 = vmatpush1.msra.mxu0 0.0
        %1637 = vmatprep.subr.mxu0 0.0
        %1638 = vmatpush1.msra.mxu0 0.0
        %1639 = vmatprep.subr.mxu0 0.0
        %1640 = vmatpush1.msra.mxu0 0.0
        %1641 = vmatprep.subr.mxu0 0.0
        %1642 = vmatpush1.msra.mxu0 0.0
        %1643 = vmatprep.subr.mxu0 0.0
        %1644 = vmatpush1.msra.mxu0 0.0
        %1645 = vmatprep.subr.mxu0 0.0
        %1646 = vmatpush1.msra.mxu0 0.0
        %1647 = vmatprep.subr.mxu0 0.0
        %1648 = vmatpush1.msra.mxu0 0.0
        %1649 = vmatprep.subr.mxu0 0.0
        %1650 = vmatpush1.msra.mxu0 0.0
        %1651 = vmatprep.subr.mxu0 0.0
        %1652 = vmatpush1.msra.mxu0 0.0
        %1653 = vmatprep.subr.mxu0 0.0
        %1654 = vmatpush1.msra.mxu0 0.0
        %1655 = vmatprep.subr.mxu0 0.0
        %1656 = vmatpush1.msra.mxu0 0.0
        %1657 = vmatprep.subr.mxu0 0.0
        %1658 = vmatpush1.msra.mxu0 0.0
        %1659 = vmatprep.subr.mxu0 0.0
        %1660 = vmatpush1.msra.mxu0 0.0
        %1661 = vmatprep.subr.mxu0 0.0
        %1662 = vmatpush1.msra.mxu0 0.0
        %1663 = vmatprep.subr.mxu0 0.0
        %1664 = vmatpush1.msra.mxu0 0.0
        %1665 = vmatprep.subr.mxu0 0.0
        %1666 = vmatpush1.msra.mxu0 0.0
        %1667 = vmatprep.subr.mxu0 0.0
        %1668 = vmatpush1.msra.mxu0 0.0
        %1669 = vmatprep.subr.mxu0 0.0
        %1670 = vmatpush1.msra.mxu0 0.0
        %1671 = vmatprep.subr.mxu0 0.0
        %1672 = vmatpush1.msra.mxu0 0.0
        %1673 = vmatprep.subr.mxu0 0.0
        %1674 = vmatpush1.msra.mxu0 0.0
        %1675 = vmatprep.mubr.f32.mxu0 0.0
        %1676 = vmatmul.mubr.f32.gmra.mrb[0].mxu0 %v1609
        %v1677 = vpop.f32.mrb[0].mxu0
        %v1678 = vadd.f32 %v1605, %v1677
        %v1679 = vpop.f32.mrb[0].mxu0
        %1680 = vdwg.mxu0
        %v1681 = vadd.f32 %v1502, %v1678
        %v1682 = vsel %vm626, %v1681, 0.0
        %1683 = vadd.xlane.f32.xlu0 %v1682
        %v1684 = vpop.xlane.xlu0 %1683
        %v1685 = vmul.f32 %v1684, %v1476
        %v1686 = vsub.f32 %v1681, %v1685
        %v1687 = vmul.f32 %v1686, %v1686
        %v1688 = vsel %vm626, %v1687, 0.0
        %1689 = vadd.xlane.f32.xlu0 %v1688
        %v1690 = vpop.xlane.xlu0 %1689
        %v1691 = vmul.f32 %v1690, %v1476
        %v1692 = vadd.f32 %v1691, 1e-05
        %v1693 = vrsqrt.pop %v1692
        %v1694 = vmul.f32 %v1686, %v1693
        %v1695 = vld [vmem:[#allocation20] sm:$0x1]
        %v1697 = vlaneseq
        %v1698 = vshrl.u32 %v1697, 7
        %v1699 = vsub.s32 0, %v1698
        %v1700 = vrot.slane %v1695, %v1699
        %v1702 = vmul.f32 %v1694, %v1700
        %v1703 = vld [vmem:[#allocation22] sm:$0x1]
        %v1705 = vlaneseq
        %v1706 = vshrl.u32 %v1705, 7
        %v1707 = vsub.s32 0, %v1706
        %v1708 = vrot.slane %v1703, %v1707
        %v1710 = vadd.f32 %v1702, %v1708
        %1711 = vst.msk [vmem:[%s613] sm:$0xff] %vm626, %v1710
        %s1712 = sand.u32 %s322, 1
        %s1713 = scalar_lea.sflag [#allocation4], %s1712
        %s1714 = sand.u32 %s322, 1
        %s1715 = smul.addr %s1714, 8
        %s1716 = scalar_lea.vmem [#allocation23], %s1715
        // Predicated region
        $region125: #{tpu_custom_call.1} parent=71 // pred_check
          %p1717 = pneg %p332
        $region126: #{tpu_custom_call.1} parent=71 // pred_check_branch
          %1719 = sbr.rel (%p1717) target = $region128
        $region127: #{tpu_custom_call.1} parent=71 // pred_region
          %s1721 = ssub.s32 128, 128
          %1722 = vsyncadd %s1713, %s1721
          %s1723 = smul.addr %s36, 128
          %s1724 = scalar_lea.hbm %s13, %s1723
          %s1726 = sshll.u32 %s1716, 4
          %s1727 = int_to_ptr.vmem [resolvable:$true] %s1726
          %1729 = dma.vmem_to_hbm [thread:$0]  %s1727, 128, %s1724, %s1713
        $region128: #{tpu_custom_call.1} parent=71 // pred_fallthru
          _
      $region72: #{tpu_custom_call.1} parent=5 // pred_fallthru
        _
      %p1730 = scmp.le.s32.totalorder 2, %s31
      // Predicated region
      $region129: #{tpu_custom_call.1} parent=5 // pred_check
        %p1731 = pneg %p1730
      $region130: #{tpu_custom_call.1} parent=5 // pred_check_branch
        %1733 = sbr.rel (%p1731) target = $region132
      $region131: #{tpu_custom_call.1} parent=5 // pred_region
        %s1734 = ssub.s32 %s31, 2
        // Predicated region
        $region133: #{tpu_custom_call.1} parent=131 // pred_check
          %p1735 = pneg %p338
        $region134: #{tpu_custom_call.1} parent=131 // pred_check_branch
          %1737 = sbr.rel (%p1735) target = $region136
        $region135: #{tpu_custom_call.1} parent=131 // pred_region
          %s1738 = sand.u32 %s323, 1
          %s1739 = scalar_lea.sflag [#allocation4], %s1738
          %s1740 = sand.u32 %s323, 1
          %s1741 = smul.addr %s1740, 8
          %s1742 = scalar_lea.vmem [#allocation23], %s1741
          %1743 = dma.done %s1739, 128
        $region136: #{tpu_custom_call.1} parent=131 // pred_fallthru
          _
      $region132: #{tpu_custom_call.1} parent=5 // pred_fallthru
        _
    $region6: #{tpu_custom_call.1} parent=1 // loop_footer
      %s35 = sadd.s32 1, %s31
    $region7: #{tpu_custom_call.1} parent=1 // loop_footer_branch
      %30 = sbr.rel target = $region3
    $region8: #{tpu_custom_call.1} parent=1 // loop_exit
      _
    %1744 = vsyncpa [#allocation3], 1
    %s1745 = scalar_lea.sflag [#allocation3], 1
    %1746 = vsyncpa %s1745, 1
    %1747 = vsyncpa [#allocation6], 1
    %1748 = vsyncpa [#allocation9], 1
    %1749 = vsyncpa [#allocation12], 1
    %1750 = vsyncpa [#allocation15], 1
    %1751 = vsyncpa [#allocation18], 1
    %1752 = vsyncpa [#allocation21], 1
    %1753 = vsyncpa [#allocation4], 1
    %s1754 = scalar_lea.sflag [#allocation4], 1
    %1755 = vsyncpa %s1754, 1

</llo_original>
